<compile_context>
chip_gen: v6e
topology: v6e:2x2x1
jax: 0.10.0
libtpu: 0.0.40
codegen_flags: <defaults>
</compile_context>

<pallas_src>
import functools

import jax
import jax.numpy as jnp
import numpy as np
from jax import lax
from jax.experimental import pallas as pl
from jax.experimental.pallas import tpu as pltpu

EPS = 1e-5


# ----------------------------------------------------------------------------
# Weight preprocessing (tiny, runs in XLA once per call): build the three
# banded (W*C, W*C) matrices so that the w-conv + channel contraction is a
# single lane-dense matmul per ky tap row.
#   Wband[ky][ws*C + ci, w*C + co] = w_hwio[ky, ws - w + 1, ci, co]  if |ws-w|<=1
# ----------------------------------------------------------------------------
def _band_weights(w_hwio, W):
    _, _, Cin, Cout = w_hwio.shape            # (3, 3, Cin, Cout)
    idx = jnp.arange(W)
    kx = idx[:, None] - idx[None, :] + 1      # (w_src, w_dst)
    valid = (kx >= 0) & (kx <= 2)
    kxc = jnp.clip(kx, 0, 2)
    bands = []
    for ky in range(3):
        m = w_hwio[ky][kxc]                                  # (W, W, Cin, Cout)
        m = jnp.where(valid[:, :, None, None], m, 0.0)
        m = jnp.transpose(m, (0, 2, 1, 3)).reshape(W * Cin, W * Cout)
        bands.append(m)
    return jnp.stack(bands, axis=0)           # (3, W*Cin, W*Cout)


# ----------------------------------------------------------------------------
# Row-block selection: largest number of whole H-slices per block such that
# the f32 block stays under ~1 MiB (keeps double-buffered in/out well inside
# the scoped VMEM limit) while preferring >=2 grid steps for megacore.
# ----------------------------------------------------------------------------
def _pick_slices_per_block(B, H, WC, dtype_bytes, target_bytes=1 << 20):
    cands = [d for d in range(1, B + 1) if B % d == 0 and (d * H) % 8 == 0]
    assert cands, "N*D*H must be a multiple of 8"
    fits = [d for d in cands if d * H * WC * dtype_bytes <= target_bytes]
    pref = [d for d in fits if B // d >= 2]
    if pref:
        return max(pref)
    if fits:
        return max(fits)
    return min(cands)


# ----------------------------------------------------------------------------
# Kernel 1: (optional BN+ReLU input transform) -> 3x3 conv -> +bias
#           + per-block partial BN statistics (sum, sum of squares).
# x block is (slices_per_block*H, W*C); ky shifts are sublane rolls masked with
# zeros at per-slice H boundaries (== zero padding in H).
# ----------------------------------------------------------------------------
def _conv_bn_stats_kernel(x_ref, wb_ref, bias_ref, scale_ref, shift_ref,
                          y_ref, stats_ref, *, H, apply_input_act):
    x = x_ref[...].astype(jnp.float32)                     # (R, WC)
    if apply_input_act:
        # BN(prev layer) scale/shift + ReLU fused into the conv input; applying
        # it BEFORE the shift keeps the conv's zero padding exact (the padded
        # values of relu(bn(y1)) are zeros).
        x = jnp.maximum(x * scale_ref[...] + shift_ref[...], 0.0)

    R, WC = x.shape
    row = lax.broadcasted_iota(jnp.int32, (R, WC), 0)
    if H & (H - 1) == 0:                      # H power of two -> cheap bit mask
        h_idx = row & (H - 1)
    else:
        h_idx = row % H

    # row h picks up x[h-1] / x[h+1]; rows at slice boundaries get zeros (H pad)
    x_up = jnp.where(h_idx == 0, 0.0, pltpu.roll(x, 1, axis=0))
    x_dn = jnp.where(h_idx == H - 1, 0.0, pltpu.roll(x, R - 1, axis=0))

    acc = jnp.dot(x_up, wb_ref[0], preferred_element_type=jnp.float32)
    acc = acc + jnp.dot(x, wb_ref[1], preferred_element_type=jnp.float32)
    acc = acc + jnp.dot(x_dn, wb_ref[2], preferred_element_type=jnp.float32)
    acc = acc + bias_ref[...]

    y_ref[...] = acc.astype(y_ref.dtype)

    # Partial BN statistics (per lane); channel reduction of the tiny partials
    # happens in JAX glue.  Row 0 = sum, row 1 = sum of squares.
    s1 = jnp.sum(acc, axis=0, keepdims=True)               # (1, WC)
    s2 = jnp.sum(acc * acc, axis=0, keepdims=True)         # (1, WC)
    r2 = lax.broadcasted_iota(jnp.int32, (2, WC), 0)
    stats_ref[0] = jnp.where(r2 == 0, s1, s2)


def conv_bn_stats(x_rows, w_bands, bias_lane, in_scale, in_shift, *, H,
                  apply_input_act, slices_per_block):
    rows, WC = x_rows.shape
    rblk = slices_per_block * H
    assert rows % rblk == 0 and rblk % 8 == 0
    grid = rows // rblk
    kern = functools.partial(_conv_bn_stats_kernel, H=H,
                             apply_input_act=apply_input_act)
    y, stats = pl.pallas_call(
        kern,
        out_shape=(jax.ShapeDtypeStruct((rows, WC), x_rows.dtype),
                   jax.ShapeDtypeStruct((grid, 2, WC), jnp.float32)),
        grid=(grid,),
        in_specs=[
            pl.BlockSpec((rblk, WC), lambda i: (i, 0)),
            pl.BlockSpec(w_bands.shape, lambda i: (0, 0, 0)),
            pl.BlockSpec((1, WC), lambda i: (0, 0)),
            pl.BlockSpec((1, WC), lambda i: (0, 0)),
            pl.BlockSpec((1, WC), lambda i: (0, 0)),
        ],
        out_specs=(pl.BlockSpec((rblk, WC), lambda i: (i, 0)),
                   pl.BlockSpec((1, 2, WC), lambda i: (i, 0, 0))),
        compiler_params=pltpu.CompilerParams(
            dimension_semantics=("parallel",)),
    )(x_rows, w_bands, bias_lane, in_scale, in_shift)
    return y, stats


# ----------------------------------------------------------------------------
# Kernel 2: BN scale/shift + residual add + ReLU (lane-dense elementwise).
# ----------------------------------------------------------------------------
def _bn_res_relu_kernel(y_ref, scale_ref, shift_ref, res_ref, o_ref):
    o_ref[...] = jnp.maximum(
        y_ref[...] * scale_ref[...] + shift_ref[...] + res_ref[...], 0.0
    ).astype(o_ref.dtype)


def bn_res_relu(y_rows, scale_lane, shift_lane, res_rows, *, row_block):
    rows, WC = y_rows.shape
    assert rows % row_block == 0 and row_block % 8 == 0
    grid = rows // row_block
    return pl.pallas_call(
        _bn_res_relu_kernel,
        out_shape=jax.ShapeDtypeStruct((rows, WC), y_rows.dtype),
        grid=(grid,),
        in_specs=[
            pl.BlockSpec((row_block, WC), lambda i: (i, 0)),
            pl.BlockSpec((1, WC), lambda i: (0, 0)),
            pl.BlockSpec((1, WC), lambda i: (0, 0)),
            pl.BlockSpec((row_block, WC), lambda i: (i, 0)),
        ],
        out_specs=pl.BlockSpec((row_block, WC), lambda i: (i, 0)),
        compiler_params=pltpu.CompilerParams(
            dimension_semantics=("parallel",)),
    )(y_rows, scale_lane, shift_lane, res_rows)


# ----------------------------------------------------------------------------
# BN finalization on tiny partials (one-pass sum / sum-of-squares).
# ----------------------------------------------------------------------------
def _finalize_bn(stats, gamma, beta, C, W, count):
    lane_sum = jnp.sum(stats[:, 0, :], axis=0)             # (W*C,)
    lane_sq = jnp.sum(stats[:, 1, :], axis=0)
    ch_sum = lane_sum.reshape(W, C).sum(axis=0)
    ch_sq = lane_sq.reshape(W, C).sum(axis=0)
    mean = ch_sum / count
    var = jnp.maximum(ch_sq / count - mean * mean, 0.0)
    scale = gamma / jnp.sqrt(var + EPS)
    shift = beta - mean * scale
    wc = W * C
    return (jnp.tile(scale, W).reshape(1, wc),
            jnp.tile(shift, W).reshape(1, wc))


# ----------------------------------------------------------------------------
# Forward pass of BasicBlock3D (downsample=None, stride=1, inplanes==outplanes)
# ----------------------------------------------------------------------------
def basic_block_3d(x_ncdhw, params):
    N, C, D, H, W = x_ncdhw.shape
    WC = W * C
    B = N * D
    rows = B * H

    # NCDHW -> lane-dense (N*D*H, W*C)
    x_rows = jnp.transpose(x_ncdhw, (0, 2, 3, 4, 1)).reshape(rows, WC)

    wb1 = _band_weights(params["w1"], W)
    wb2 = _band_weights(params["w2"], W)
    b1 = jnp.tile(params["b1"], W).reshape(1, WC)
    b2 = jnp.tile(params["b2"], W).reshape(1, WC)
    ones = jnp.ones((1, WC), x_rows.dtype)
    zeros = jnp.zeros((1, WC), x_rows.dtype)

    spb = _pick_slices_per_block(B, H, WC, x_rows.dtype.itemsize)
    rblk = spb * H
    count = rows * W  # elements per channel for BN statistics

    # conv1 + bias + partial BN1 stats
    y1, st1 = conv_bn_stats(x_rows, wb1, b1, ones, zeros, H=H,
                            apply_input_act=False, slices_per_block=spb)
    s1, t1 = _finalize_bn(st1, params["gamma1"], params["beta1"], C, W, count)

    # (BN1 + ReLU fused into input transform) conv2 + bias + partial BN2 stats
    y2, st2 = conv_bn_stats(y1, wb2, b2, s1, t1, H=H,
                            apply_input_act=True, slices_per_block=spb)
    s2, t2 = _finalize_bn(st2, params["gamma2"], params["beta2"], C, W, count)

    # BN2 + residual + ReLU
    out_rows = bn_res_relu(y2, s2, t2, x_rows, row_block=rblk)

    out = out_rows.reshape(N, D, H, W, C)
    return jnp.transpose(out, (0, 4, 1, 2, 3))


# ----------------------------------------------------------------------------
# Pure-JAX reference (mirrors the PyTorch forward, training-mode BN)
# ----------------------------------------------------------------------------
def reference(x_ncdhw, params):
    N, C, D, H, W = x_ncdhw.shape
    x = jnp.transpose(x_ncdhw, (0, 2, 3, 4, 1)).reshape(N * D, H, W, C)

    def conv_ref(inp, w_hwio, b):
        return lax.conv_general_dilated(
            inp, w_hwio, window_strides=(1, 1), padding="SAME",
            dimension_numbers=("NHWC", "HWIO", "NHWC")) + b

    def bn_ref(inp, g, bta):
        m = jnp.mean(inp, axis=(0, 1, 2))
        v = jnp.mean(jnp.square(inp - m), axis=(0, 1, 2))
        return (inp - m) / jnp.sqrt(v + EPS) * g + bta

    h = jax.nn.relu(bn_ref(conv_ref(x, params["w1"], params["b1"]),
                           params["gamma1"], params["beta1"]))
    y = bn_ref(conv_ref(h, params["w2"], params["b2"]),
               params["gamma2"], params["beta2"])
    out = jax.nn.relu(y + x)
    out = out.reshape(N, D, H, W, C)
    return jnp.transpose(out, (0, 4, 1, 2, 3))


if __name__ == "__main__":
    # Small shapes: batch=2, inplanes=outplanes=8, depth=4, H=W=16
    N, C, D, H, W = 2, 8, 4, 16, 16
    key = jax.random.PRNGKey(0)
    k = jax.random.split(key, 8)

    # PyTorch Conv3d weight shape is (Cout, Cin, 1, 3, 3); stored here directly
    # as HWIO = (3, 3, Cin, Cout).
    params = {
        "w1": 0.1 * jax.random.normal(k[0], (3, 3, C, C), jnp.float32),
        "b1": 0.1 * jax.random.normal(k[1], (C,), jnp.float32),
        "gamma1": 1.0 + 0.1 * jax.random.normal(k[2], (C,), jnp.float32),
        "beta1": 0.1 * jax.random.normal(k[3], (C,), jnp.float32),
        "w2": 0.1 * jax.random.normal(k[4], (3, 3, C, C), jnp.float32),
        "b2": 0.1 * jax.random.normal(k[5], (C,), jnp.float32),
        "gamma2": 1.0 + 0.1 * jax.random.normal(k[6], (C,), jnp.float32),
        "beta2": 0.1 * jax.random.normal(k[7], (C,), jnp.float32),
    }
    x = jax.random.normal(jax.random.PRNGKey(1), (N, C, D, H, W), jnp.float32)

    fwd = jax.jit(basic_block_3d)
    out = jax.block_until_ready(fwd(x, params))
    ref = jax.block_until_ready(reference(x, params))

    np.testing.assert_allclose(np.asarray(out), np.asarray(ref),
                               rtol=1e-4, atol=1e-4)
    assert out.shape == (N, C, D, H, W)
    print("KERNEL_OK")
</pallas_src>

<mosaic_0001>
module attributes {stable_mosaic.version = 11 : i64} {
  func.func @_conv_bn_stats_kernel(%arg0: i32, %arg1: memref<64x128xf32, #tpu.memory_space<vmem>>, %arg2: memref<3x128x128xf32, #tpu.memory_space<vmem>>, %arg3: memref<1x128xf32, #tpu.memory_space<vmem>>, %arg4: memref<1x128xf32, #tpu.memory_space<vmem>>, %arg5: memref<1x128xf32, #tpu.memory_space<vmem>>, %arg6: memref<64x128xf32, #tpu.memory_space<vmem>>, %arg7: memref<1x2x128xf32, #tpu.memory_space<vmem>>) attributes {dimension_semantics = [#tpu.dimension_semantics<parallel>], iteration_bounds = array<i64: 2>, scalar_prefetch = 0 : i64, scratch_operands = 0 : i64, tpu.core_type = #tpu.core_type<tc>, window_params = [{transform_indices = @transform_0, window_bounds = array<i64: 64, 128>}, {pipeline_mode = #tpu.pipeline_mode<synchronous>, transform_indices = @transform_1, window_bounds = array<i64: 3, 128, 128>}, {pipeline_mode = #tpu.pipeline_mode<synchronous>, transform_indices = @transform_2, window_bounds = array<i64: 1, 128>}, {pipeline_mode = #tpu.pipeline_mode<synchronous>, transform_indices = @transform_3, window_bounds = array<i64: 1, 128>}, {pipeline_mode = #tpu.pipeline_mode<synchronous>, transform_indices = @transform_4, window_bounds = array<i64: 1, 128>}, {transform_indices = @transform_5, window_bounds = array<i64: 64, 128>}, {transform_indices = @transform_6, window_bounds = array<i64: 1, 2, 128>}]} {
    %c0 = arith.constant 0 : index
    %c0_0 = arith.constant 0 : index
    %0 = vector.load %arg1[%c0, %c0_0] : memref<64x128xf32, #tpu.memory_space<vmem>>, vector<64x128xf32>
    %1 = tpu.iota {dimensions = array<i32: 0>} : vector<64x128xi32>
    %c15_i32 = arith.constant 15 : i32
    %2 = vector.broadcast %c15_i32 : i32 to vector<64x128xi32>
    %3 = arith.andi %1, %2 : vector<64x128xi32>
    %c0_i32 = arith.constant 0 : i32
    %4 = vector.broadcast %c0_i32 : i32 to vector<64x128xi32>
    %5 = arith.cmpi eq, %3, %4 : vector<64x128xi32>
    %c1_i32 = arith.constant 1 : i32
    %6 = tpu.dynamic_rotate %0 by %c1_i32 dim 0 : vector<64x128xf32>, i32 -> vector<64x128xf32>
    %cst = arith.constant 0.000000e+00 : f32
    %7 = vector.broadcast %cst : f32 to vector<64x128xf32>
    %8 = arith.select %5, %7, %6 : vector<64x128xi1>, vector<64x128xf32>
    %c15_i32_1 = arith.constant 15 : i32
    %9 = vector.broadcast %c15_i32_1 : i32 to vector<64x128xi32>
    %10 = arith.cmpi eq, %3, %9 : vector<64x128xi32>
    %c63_i32 = arith.constant 63 : i32
    %11 = tpu.dynamic_rotate %0 by %c63_i32 dim 0 : vector<64x128xf32>, i32 -> vector<64x128xf32>
    %cst_2 = arith.constant 0.000000e+00 : f32
    %12 = vector.broadcast %cst_2 : f32 to vector<64x128xf32>
    %13 = arith.select %10, %12, %11 : vector<64x128xi1>, vector<64x128xf32>
    %c0_3 = arith.constant 0 : index
    %c0_4 = arith.constant 0 : index
    %c0_5 = arith.constant 0 : index
    %14 = vector.load %arg2[%c0_3, %c0_4, %c0_5] : memref<3x128x128xf32, #tpu.memory_space<vmem>>, vector<1x128x128xf32>
    %15 = vector.shape_cast %14 : vector<1x128x128xf32> to vector<128x128xf32>
    %cst_6 = arith.constant dense<0.000000e+00> : vector<64x128xf32>
    %16 = tpu.matmul %8, %15, %cst_6 {dimension_numbers = #tpu.dot_dimension_numbers<[1], [0], [0], [1], [0, 0, 1, 1], [], []>} : vector<64x128xf32>, vector<128x128xf32>, vector<64x128xf32> -> vector<64x128xf32>
    %c1 = arith.constant 1 : index
    %c0_7 = arith.constant 0 : index
    %c0_8 = arith.constant 0 : index
    %17 = vector.load %arg2[%c1, %c0_7, %c0_8] : memref<3x128x128xf32, #tpu.memory_space<vmem>>, vector<1x128x128xf32>
    %18 = vector.shape_cast %17 : vector<1x128x128xf32> to vector<128x128xf32>
    %cst_9 = arith.constant dense<0.000000e+00> : vector<64x128xf32>
    %19 = tpu.matmul %0, %18, %cst_9 {dimension_numbers = #tpu.dot_dimension_numbers<[1], [0], [0], [1], [0, 0, 1, 1], [], []>} : vector<64x128xf32>, vector<128x128xf32>, vector<64x128xf32> -> vector<64x128xf32>
    %20 = arith.addf %16, %19 : vector<64x128xf32>
    %c2 = arith.constant 2 : index
    %c0_10 = arith.constant 0 : index
    %c0_11 = arith.constant 0 : index
    %21 = vector.load %arg2[%c2, %c0_10, %c0_11] : memref<3x128x128xf32, #tpu.memory_space<vmem>>, vector<1x128x128xf32>
    %22 = vector.shape_cast %21 : vector<1x128x128xf32> to vector<128x128xf32>
    %cst_12 = arith.constant dense<0.000000e+00> : vector<64x128xf32>
    %23 = tpu.matmul %13, %22, %cst_12 {dimension_numbers = #tpu.dot_dimension_numbers<[1], [0], [0], [1], [0, 0, 1, 1], [], []>} : vector<64x128xf32>, vector<128x128xf32>, vector<64x128xf32> -> vector<64x128xf32>
    %24 = arith.addf %20, %23 : vector<64x128xf32>
    %c0_13 = arith.constant 0 : index
    %c0_14 = arith.constant 0 : index
    %25 = vector.load %arg3[%c0_13, %c0_14] : memref<1x128xf32, #tpu.memory_space<vmem>>, vector<1x128xf32>
    %26 = vector.broadcast %25 : vector<1x128xf32> to vector<64x128xf32>
    %27 = arith.addf %24, %26 : vector<64x128xf32>
    %c0_15 = arith.constant 0 : index
    %c0_16 = arith.constant 0 : index
    %28 = vector.load %arg6[%c0_15, %c0_16] : memref<64x128xf32, #tpu.memory_space<vmem>>, vector<64x128xf32>
    tpu.vector_store %arg6[%c0_15, %c0_16], %27 {strides = array<i32>} : memref<64x128xf32, #tpu.memory_space<vmem>>, vector<64x128xf32>,
    %cst_17 = arith.constant dense<0.000000e+00> : vector<128xf32>
    %29 = vector.multi_reduction <add>, %27, %cst_17 [0] : vector<64x128xf32> to vector<128xf32>
    %30 = vector.shape_cast %29 : vector<128xf32> to vector<1x128xf32>
    %31 = arith.mulf %27, %27 : vector<64x128xf32>
    %cst_18 = arith.constant dense<0.000000e+00> : vector<128xf32>
    %32 = vector.multi_reduction <add>, %31, %cst_18 [0] : vector<64x128xf32> to vector<128xf32>
    %33 = vector.shape_cast %32 : vector<128xf32> to vector<1x128xf32>
    %34 = tpu.iota {dimensions = array<i32: 0>} : vector<2x128xi32>
    %c0_i32_19 = arith.constant 0 : i32
    %35 = vector.broadcast %c0_i32_19 : i32 to vector<2x128xi32>
    %36 = arith.cmpi eq, %34, %35 : vector<2x128xi32>
    %37 = vector.shape_cast %30 : vector<1x128xf32> to vector<1x128xf32>
    %38 = vector.broadcast %37 : vector<1x128xf32> to vector<2x128xf32>
    %39 = vector.shape_cast %33 : vector<1x128xf32> to vector<1x128xf32>
    %40 = vector.broadcast %39 : vector<1x128xf32> to vector<2x128xf32>
    %41 = arith.select %36, %38, %40 : vector<2x128xi1>, vector<2x128xf32>
    %c0_20 = arith.constant 0 : index
    %c0_21 = arith.constant 0 : index
    %c0_22 = arith.constant 0 : index
    %42 = vector.load %arg7[%c0_20, %c0_21, %c0_22] : memref<1x2x128xf32, #tpu.memory_space<vmem>>, vector<1x2x128xf32>
    %43 = vector.shape_cast %42 : vector<1x2x128xf32> to vector<2x128xf32>
    %44 = vector.shape_cast %41 : vector<2x128xf32> to vector<1x2x128xf32>
    tpu.vector_store %arg7[%c0_20, %c0_21, %c0_22], %44 {strides = array<i32>} : memref<1x2x128xf32, #tpu.memory_space<vmem>>, vector<1x2x128xf32>,
    return
  }
  func.func @transform_0(%arg0: i32) -> (i32, i32) {
    %c0_i32 = arith.constant 0 : i32
    %c0_i32_0 = arith.constant 0 : i32
    return %arg0, %c0_i32 : i32, i32
  }
  func.func @transform_1(%arg0: i32) -> (i32, i32, i32) {
    %c0_i32 = arith.constant 0 : i32
    %c0_i32_0 = arith.constant 0 : i32
    %c0_i32_1 = arith.constant 0 : i32
    %c0_i32_2 = arith.constant 0 : i32
    return %c0_i32, %c0_i32_0, %c0_i32_1 : i32, i32, i32
  }
  func.func @transform_2(%arg0: i32) -> (i32, i32) {
    %c0_i32 = arith.constant 0 : i32
    %c0_i32_0 = arith.constant 0 : i32
    %c0_i32_1 = arith.constant 0 : i32
    return %c0_i32, %c0_i32_0 : i32, i32
  }
  func.func @transform_3(%arg0: i32) -> (i32, i32) {
    %c0_i32 = arith.constant 0 : i32
    %c0_i32_0 = arith.constant 0 : i32
    %c0_i32_1 = arith.constant 0 : i32
    return %c0_i32, %c0_i32_0 : i32, i32
  }
  func.func @transform_4(%arg0: i32) -> (i32, i32) {
    %c0_i32 = arith.constant 0 : i32
    %c0_i32_0 = arith.constant 0 : i32
    %c0_i32_1 = arith.constant 0 : i32
    return %c0_i32, %c0_i32_0 : i32, i32
  }
  func.func @transform_5(%arg0: i32) -> (i32, i32) {
    %c0_i32 = arith.constant 0 : i32
    %c0_i32_0 = arith.constant 0 : i32
    return %arg0, %c0_i32 : i32, i32
  }
  func.func @transform_6(%arg0: i32) -> (i32, i32, i32) {
    %c0_i32 = arith.constant 0 : i32
    %c0_i32_0 = arith.constant 0 : i32
    %c0_i32_1 = arith.constant 0 : i32
    return %arg0, %c0_i32, %c0_i32_0 : i32, i32, i32
  }
}

module attributes {stable_mosaic.version = 11 : i64} {
  func.func @_conv_bn_stats_kernel(%arg0: i32, %arg1: memref<64x128xf32, #tpu.memory_space<vmem>>, %arg2: memref<3x128x128xf32, #tpu.memory_space<vmem>>, %arg3: memref<1x128xf32, #tpu.memory_space<vmem>>, %arg4: memref<1x128xf32, #tpu.memory_space<vmem>>, %arg5: memref<1x128xf32, #tpu.memory_space<vmem>>, %arg6: memref<64x128xf32, #tpu.memory_space<vmem>>, %arg7: memref<1x2x128xf32, #tpu.memory_space<vmem>>) attributes {dimension_semantics = [#tpu.dimension_semantics<parallel>], iteration_bounds = array<i64: 2>, scalar_prefetch = 0 : i64, scratch_operands = 0 : i64, tpu.core_type = #tpu.core_type<tc>, window_params = [{transform_indices = @transform_0, window_bounds = array<i64: 64, 128>}, {pipeline_mode = #tpu.pipeline_mode<synchronous>, transform_indices = @transform_1, window_bounds = array<i64: 3, 128, 128>}, {pipeline_mode = #tpu.pipeline_mode<synchronous>, transform_indices = @transform_2, window_bounds = array<i64: 1, 128>}, {pipeline_mode = #tpu.pipeline_mode<synchronous>, transform_indices = @transform_3, window_bounds = array<i64: 1, 128>}, {pipeline_mode = #tpu.pipeline_mode<synchronous>, transform_indices = @transform_4, window_bounds = array<i64: 1, 128>}, {transform_indices = @transform_5, window_bounds = array<i64: 64, 128>}, {transform_indices = @transform_6, window_bounds = array<i64: 1, 2, 128>}]} {
    %c0 = arith.constant 0 : index
    %c0_0 = arith.constant 0 : index
    %0 = vector.load %arg1[%c0, %c0_0] : memref<64x128xf32, #tpu.memory_space<vmem>>, vector<64x128xf32>
    %c0_1 = arith.constant 0 : index
    %c0_2 = arith.constant 0 : index
    %1 = vector.load %arg4[%c0_1, %c0_2] : memref<1x128xf32, #tpu.memory_space<vmem>>, vector<1x128xf32>
    %2 = vector.broadcast %1 : vector<1x128xf32> to vector<64x128xf32>
    %3 = arith.mulf %0, %2 : vector<64x128xf32>
    %c0_3 = arith.constant 0 : index
    %c0_4 = arith.constant 0 : index
    %4 = vector.load %arg5[%c0_3, %c0_4] : memref<1x128xf32, #tpu.memory_space<vmem>>, vector<1x128xf32>
    %5 = vector.broadcast %4 : vector<1x128xf32> to vector<64x128xf32>
    %6 = arith.addf %3, %5 : vector<64x128xf32>
    %cst = arith.constant 0.000000e+00 : f32
    %7 = vector.broadcast %cst : f32 to vector<64x128xf32>
    %8 = arith.maximumf %6, %7 : vector<64x128xf32>
    %9 = tpu.iota {dimensions = array<i32: 0>} : vector<64x128xi32>
    %c15_i32 = arith.constant 15 : i32
    %10 = vector.broadcast %c15_i32 : i32 to vector<64x128xi32>
    %11 = arith.andi %9, %10 : vector<64x128xi32>
    %c0_i32 = arith.constant 0 : i32
    %12 = vector.broadcast %c0_i32 : i32 to vector<64x128xi32>
    %13 = arith.cmpi eq, %11, %12 : vector<64x128xi32>
    %c1_i32 = arith.constant 1 : i32
    %14 = tpu.dynamic_rotate %8 by %c1_i32 dim 0 : vector<64x128xf32>, i32 -> vector<64x128xf32>
    %cst_5 = arith.constant 0.000000e+00 : f32
    %15 = vector.broadcast %cst_5 : f32 to vector<64x128xf32>
    %16 = arith.select %13, %15, %14 : vector<64x128xi1>, vector<64x128xf32>
    %c15_i32_6 = arith.constant 15 : i32
    %17 = vector.broadcast %c15_i32_6 : i32 to vector<64x128xi32>
    %18 = arith.cmpi eq, %11, %17 : vector<64x128xi32>
    %c63_i32 = arith.constant 63 : i32
    %19 = tpu.dynamic_rotate %8 by %c63_i32 dim 0 : vector<64x128xf32>, i32 -> vector<64x128xf32>
    %cst_7 = arith.constant 0.000000e+00 : f32
    %20 = vector.broadcast %cst_7 : f32 to vector<64x128xf32>
    %21 = arith.select %18, %20, %19 : vector<64x128xi1>, vector<64x128xf32>
    %c0_8 = arith.constant 0 : index
    %c0_9 = arith.constant 0 : index
    %c0_10 = arith.constant 0 : index
    %22 = vector.load %arg2[%c0_8, %c0_9, %c0_10] : memref<3x128x128xf32, #tpu.memory_space<vmem>>, vector<1x128x128xf32>
    %23 = vector.shape_cast %22 : vector<1x128x128xf32> to vector<128x128xf32>
    %cst_11 = arith.constant dense<0.000000e+00> : vector<64x128xf32>
    %24 = tpu.matmul %16, %23, %cst_11 {dimension_numbers = #tpu.dot_dimension_numbers<[1], [0], [0], [1], [0, 0, 1, 1], [], []>} : vector<64x128xf32>, vector<128x128xf32>, vector<64x128xf32> -> vector<64x128xf32>
    %c1 = arith.constant 1 : index
    %c0_12 = arith.constant 0 : index
    %c0_13 = arith.constant 0 : index
    %25 = vector.load %arg2[%c1, %c0_12, %c0_13] : memref<3x128x128xf32, #tpu.memory_space<vmem>>, vector<1x128x128xf32>
    %26 = vector.shape_cast %25 : vector<1x128x128xf32> to vector<128x128xf32>
    %cst_14 = arith.constant dense<0.000000e+00> : vector<64x128xf32>
    %27 = tpu.matmul %8, %26, %cst_14 {dimension_numbers = #tpu.dot_dimension_numbers<[1], [0], [0], [1], [0, 0, 1, 1], [], []>} : vector<64x128xf32>, vector<128x128xf32>, vector<64x128xf32> -> vector<64x128xf32>
    %28 = arith.addf %24, %27 : vector<64x128xf32>
    %c2 = arith.constant 2 : index
    %c0_15 = arith.constant 0 : index
    %c0_16 = arith.constant 0 : index
    %29 = vector.load %arg2[%c2, %c0_15, %c0_16] : memref<3x128x128xf32, #tpu.memory_space<vmem>>, vector<1x128x128xf32>
    %30 = vector.shape_cast %29 : vector<1x128x128xf32> to vector<128x128xf32>
    %cst_17 = arith.constant dense<0.000000e+00> : vector<64x128xf32>
    %31 = tpu.matmul %21, %30, %cst_17 {dimension_numbers = #tpu.dot_dimension_numbers<[1], [0], [0], [1], [0, 0, 1, 1], [], []>} : vector<64x128xf32>, vector<128x128xf32>, vector<64x128xf32> -> vector<64x128xf32>
    %32 = arith.addf %28, %31 : vector<64x128xf32>
    %c0_18 = arith.constant 0 : index
    %c0_19 = arith.constant 0 : index
    %33 = vector.load %arg3[%c0_18, %c0_19] : memref<1x128xf32, #tpu.memory_space<vmem>>, vector<1x128xf32>
    %34 = vector.broadcast %33 : vector<1x128xf32> to vector<64x128xf32>
    %35 = arith.addf %32, %34 : vector<64x128xf32>
    %c0_20 = arith.constant 0 : index
    %c0_21 = arith.constant 0 : index
    %36 = vector.load %arg6[%c0_20, %c0_21] : memref<64x128xf32, #tpu.memory_space<vmem>>, vector<64x128xf32>
    tpu.vector_store %arg6[%c0_20, %c0_21], %35 {strides = array<i32>} : memref<64x128xf32, #tpu.memory_space<vmem>>, vector<64x128xf32>,
    %cst_22 = arith.constant dense<0.000000e+00> : vector<128xf32>
    %37 = vector.multi_reduction <add>, %35, %cst_22 [0] : vector<64x128xf32> to vector<128xf32>
    %38 = vector.shape_cast %37 : vector<128xf32> to vector<1x128xf32>
    %39 = arith.mulf %35, %35 : vector<64x128xf32>
    %cst_23 = arith.constant dense<0.000000e+00> : vector<128xf32>
    %40 = vector.multi_reduction <add>, %39, %cst_23 [0] : vector<64x128xf32> to vector<128xf32>
    %41 = vector.shape_cast %40 : vector<128xf32> to vector<1x128xf32>
    %42 = tpu.iota {dimensions = array<i32: 0>} : vector<2x128xi32>
    %c0_i32_24 = arith.constant 0 : i32
    %43 = vector.broadcast %c0_i32_24 : i32 to vector<2x128xi32>
    %44 = arith.cmpi eq, %42, %43 : vector<2x128xi32>
    %45 = vector.shape_cast %38 : vector<1x128xf32> to vector<1x128xf32>
    %46 = vector.broadcast %45 : vector<1x128xf32> to vector<2x128xf32>
    %47 = vector.shape_cast %41 : vector<1x128xf32> to vector<1x128xf32>
    %48 = vector.broadcast %47 : vector<1x128xf32> to vector<2x128xf32>
    %49 = arith.select %44, %46, %48 : vector<2x128xi1>, vector<2x128xf32>
    %c0_25 = arith.constant 0 : index
    %c0_26 = arith.constant 0 : index
    %c0_27 = arith.constant 0 : index
    %50 = vector.load %arg7[%c0_25, %c0_26, %c0_27] : memref<1x2x128xf32, #tpu.memory_space<vmem>>, vector<1x2x128xf32>
    %51 = vector.shape_cast %50 : vector<1x2x128xf32> to vector<2x128xf32>
    %52 = vector.shape_cast %49 : vector<2x128xf32> to vector<1x2x128xf32>
    tpu.vector_store %arg7[%c0_25, %c0_26, %c0_27], %52 {strides = array<i32>} : memref<1x2x128xf32, #tpu.memory_space<vmem>>, vector<1x2x128xf32>,
    return
  }
  func.func @transform_0(%arg0: i32) -> (i32, i32) {
    %c0_i32 = arith.constant 0 : i32
    %c0_i32_0 = arith.constant 0 : i32
    return %arg0, %c0_i32 : i32, i32
  }
  func.func @transform_1(%arg0: i32) -> (i32, i32, i32) {
    %c0_i32 = arith.constant 0 : i32
    %c0_i32_0 = arith.constant 0 : i32
    %c0_i32_1 = arith.constant 0 : i32
    %c0_i32_2 = arith.constant 0 : i32
    return %c0_i32, %c0_i32_0, %c0_i32_1 : i32, i32, i32
  }
  func.func @transform_2(%arg0: i32) -> (i32, i32) {
    %c0_i32 = arith.constant 0 : i32
    %c0_i32_0 = arith.constant 0 : i32
    %c0_i32_1 = arith.constant 0 : i32
    return %c0_i32, %c0_i32_0 : i32, i32
  }
  func.func @transform_3(%arg0: i32) -> (i32, i32) {
    %c0_i32 = arith.constant 0 : i32
    %c0_i32_0 = arith.constant 0 : i32
    %c0_i32_1 = arith.constant 0 : i32
    return %c0_i32, %c0_i32_0 : i32, i32
  }
  func.func @transform_4(%arg0: i32) -> (i32, i32) {
    %c0_i32 = arith.constant 0 : i32
    %c0_i32_0 = arith.constant 0 : i32
    %c0_i32_1 = arith.constant 0 : i32
    return %c0_i32, %c0_i32_0 : i32, i32
  }
  func.func @transform_5(%arg0: i32) -> (i32, i32) {
    %c0_i32 = arith.constant 0 : i32
    %c0_i32_0 = arith.constant 0 : i32
    return %arg0, %c0_i32 : i32, i32
  }
  func.func @transform_6(%arg0: i32) -> (i32, i32, i32) {
    %c0_i32 = arith.constant 0 : i32
    %c0_i32_0 = arith.constant 0 : i32
    %c0_i32_1 = arith.constant 0 : i32
    return %arg0, %c0_i32, %c0_i32_0 : i32, i32, i32
  }
}

module attributes {stable_mosaic.version = 11 : i64} {
  func.func @_bn_res_relu_kernel(%arg0: i32, %arg1: memref<64x128xf32, #tpu.memory_space<vmem>>, %arg2: memref<1x128xf32, #tpu.memory_space<vmem>>, %arg3: memref<1x128xf32, #tpu.memory_space<vmem>>, %arg4: memref<64x128xf32, #tpu.memory_space<vmem>>, %arg5: memref<64x128xf32, #tpu.memory_space<vmem>>) attributes {dimension_semantics = [#tpu.dimension_semantics<parallel>], iteration_bounds = array<i64: 2>, scalar_prefetch = 0 : i64, scratch_operands = 0 : i64, tpu.core_type = #tpu.core_type<tc>, window_params = [{transform_indices = @transform_0, window_bounds = array<i64: 64, 128>}, {pipeline_mode = #tpu.pipeline_mode<synchronous>, transform_indices = @transform_1, window_bounds = array<i64: 1, 128>}, {pipeline_mode = #tpu.pipeline_mode<synchronous>, transform_indices = @transform_2, window_bounds = array<i64: 1, 128>}, {transform_indices = @transform_3, window_bounds = array<i64: 64, 128>}, {transform_indices = @transform_4, window_bounds = array<i64: 64, 128>}]} {
    %c0 = arith.constant 0 : index
    %c0_0 = arith.constant 0 : index
    %0 = vector.load %arg1[%c0, %c0_0] : memref<64x128xf32, #tpu.memory_space<vmem>>, vector<64x128xf32>
    %c0_1 = arith.constant 0 : index
    %c0_2 = arith.constant 0 : index
    %1 = vector.load %arg2[%c0_1, %c0_2] : memref<1x128xf32, #tpu.memory_space<vmem>>, vector<1x128xf32>
    %2 = vector.broadcast %1 : vector<1x128xf32> to vector<64x128xf32>
    %3 = arith.mulf %0, %2 : vector<64x128xf32>
    %c0_3 = arith.constant 0 : index
    %c0_4 = arith.constant 0 : index
    %4 = vector.load %arg3[%c0_3, %c0_4] : memref<1x128xf32, #tpu.memory_space<vmem>>, vector<1x128xf32>
    %5 = vector.broadcast %4 : vector<1x128xf32> to vector<64x128xf32>
    %6 = arith.addf %3, %5 : vector<64x128xf32>
    %c0_5 = arith.constant 0 : index
    %c0_6 = arith.constant 0 : index
    %7 = vector.load %arg4[%c0_5, %c0_6] : memref<64x128xf32, #tpu.memory_space<vmem>>, vector<64x128xf32>
    %8 = arith.addf %6, %7 : vector<64x128xf32>
    %cst = arith.constant 0.000000e+00 : f32
    %9 = vector.broadcast %cst : f32 to vector<64x128xf32>
    %10 = arith.maximumf %8, %9 : vector<64x128xf32>
    %c0_7 = arith.constant 0 : index
    %c0_8 = arith.constant 0 : index
    %11 = vector.load %arg5[%c0_7, %c0_8] : memref<64x128xf32, #tpu.memory_space<vmem>>, vector<64x128xf32>
    tpu.vector_store %arg5[%c0_7, %c0_8], %10 {strides = array<i32>} : memref<64x128xf32, #tpu.memory_space<vmem>>, vector<64x128xf32>,
    return
  }
  func.func @transform_0(%arg0: i32) -> (i32, i32) {
    %c0_i32 = arith.constant 0 : i32
    %c0_i32_0 = arith.constant 0 : i32
    return %arg0, %c0_i32 : i32, i32
  }
  func.func @transform_1(%arg0: i32) -> (i32, i32) {
    %c0_i32 = arith.constant 0 : i32
    %c0_i32_0 = arith.constant 0 : i32
    %c0_i32_1 = arith.constant 0 : i32
    return %c0_i32, %c0_i32_0 : i32, i32
  }
  func.func @transform_2(%arg0: i32) -> (i32, i32) {
    %c0_i32 = arith.constant 0 : i32
    %c0_i32_0 = arith.constant 0 : i32
    %c0_i32_1 = arith.constant 0 : i32
    return %c0_i32, %c0_i32_0 : i32, i32
  }
  func.func @transform_3(%arg0: i32) -> (i32, i32) {
    %c0_i32 = arith.constant 0 : i32
    %c0_i32_0 = arith.constant 0 : i32
    return %arg0, %c0_i32 : i32, i32
  }
  func.func @transform_4(%arg0: i32) -> (i32, i32) {
    %c0_i32 = arith.constant 0 : i32
    %c0_i32_0 = arith.constant 0 : i32
    return %arg0, %c0_i32 : i32, i32
  }
}

</mosaic_0001>

<llo_original>
// kernel: tile.33
$region0: #{tile.33}
  #allocation0 [shape = 's32[1]{0}', space=sflag, size = 0x4, scoped, tag = 'scoped memory for tile.33']
  %s0 = inlined_call_operand.vmem [shape: f32[8], index: 0, kind: input, shape index: {}]
  %s1 = inlined_call_operand.vmem [shape: f32[16,8], index: 1, kind: output, shape index: {}]
  // Predicated region
  $region2: #{tile.33} parent=0 // pred_check
    _
  $region3: #{tile.33} parent=0 // pred_check_branch
    %3 = sbr.rel (0) target = $region5
  $region4: #{tile.33} parent=0 // pred_region
    _
  $region5: #{tile.33} parent=0 // pred_fallthru
    _
  %v4 = vld [vmem:[%s0] ss:$0 sm:$0xff]
  %5 = vst [vmem:[%s1] sm:$0xff] %v4
  %s6 = scalar_lea.vmem %s1, 8
  %7 = vst [vmem:[%s6] sm:$0xff] %v4

// kernel: tile.34
$region0: #{tile.34}
  %s0 = inlined_call_operand.vmem [shape: f32[16,8], index: 0, kind: input, shape index: {}]
  %s1 = inlined_call_operand.vmem [shape: f32[1,128], index: 1, kind: output, shape index: {}]
  $region1: #{tile.34} parent=0
    #allocation0 [shape = 'u8[4096]{0}', space=vmem, size = 0x1000, scoped, tag = 'scoped mem for output reshape']
    %v2 = vld [vmem:[%s0] sm:$0x1]
    %vm3 = vcmask 64512
    %4 = vst.msk [vmem:[#allocation0] sm:$0x1] %vm3, %v2
    %s5 = scalar_lea.vmem %s0, 15
    %v6 = vld [vmem:[%s5] sm:$0x1]
    %7 = vrot.lane.b32.xlu0 %v6, 120
    %v8 = vpop.permute.xlu0 %7
    %vm9 = vcmask 1048512
    %10 = vst.msk [vmem:[#allocation0] sm:$0x1] %vm9, %v8
    %s11 = scalar_lea.vmem %s0, 14
    %v12 = vld [vmem:[%s11] sm:$0x1]
    %13 = vrot.lane.b32.xlu0 %v12, 112
    %v14 = vpop.permute.xlu0 %13
    %vm15 = vcmask 982912
    %16 = vst.msk [vmem:[#allocation0] sm:$0x1] %vm15, %v14
    %s17 = scalar_lea.vmem %s0, 13
    %v18 = vld [vmem:[%s17] sm:$0x1]
    %19 = vrot.lane.b32.xlu0 %v18, 104
    %v20 = vpop.permute.xlu0 %19
    %vm21 = vcmask 917312
    %22 = vst.msk [vmem:[#allocation0] sm:$0x1] %vm21, %v20
    %s23 = scalar_lea.vmem %s0, 12
    %v24 = vld [vmem:[%s23] sm:$0x1]
    %25 = vrot.lane.b32.xlu0 %v24, 96
    %v26 = vpop.permute.xlu0 %25
    %vm27 = vcmask 851712
    %28 = vst.msk [vmem:[#allocation0] sm:$0x1] %vm27, %v26
    %s29 = scalar_lea.vmem %s0, 11
    %v30 = vld [vmem:[%s29] sm:$0x1]
    %31 = vrot.lane.b32.xlu0 %v30, 88
    %v32 = vpop.permute.xlu0 %31
    %vm33 = vcmask 786112
    %34 = vst.msk [vmem:[#allocation0] sm:$0x1] %vm33, %v32
    %s35 = scalar_lea.vmem %s0, 10
    %v36 = vld [vmem:[%s35] sm:$0x1]
    %37 = vrot.lane.b32.xlu0 %v36, 80
    %v38 = vpop.permute.xlu0 %37
    %vm39 = vcmask 720512
    %40 = vst.msk [vmem:[#allocation0] sm:$0x1] %vm39, %v38
    %s41 = scalar_lea.vmem %s0, 9
    %v42 = vld [vmem:[%s41] sm:$0x1]
    %43 = vrot.lane.b32.xlu0 %v42, 72
    %v44 = vpop.permute.xlu0 %43
    %vm45 = vcmask 654912
    %46 = vst.msk [vmem:[#allocation0] sm:$0x1] %vm45, %v44
    %s47 = scalar_lea.vmem %s0, 8
    %v48 = vld [vmem:[%s47] sm:$0x1]
    %49 = vrot.lane.b32.xlu0 %v48, 64
    %v50 = vpop.permute.xlu0 %49
    %vm51 = vcmask 589312
    %52 = vst.msk [vmem:[#allocation0] sm:$0x1] %vm51, %v50
    %s53 = scalar_lea.vmem %s0, 7
    %v54 = vld [vmem:[%s53] sm:$0x1]
    %55 = vrot.lane.b32.xlu0 %v54, 56
    %v56 = vpop.permute.xlu0 %55
    %vm57 = vcmask 523712
    %58 = vst.msk [vmem:[#allocation0] sm:$0x1] %vm57, %v56
    %s59 = scalar_lea.vmem %s0, 6
    %v60 = vld [vmem:[%s59] sm:$0x1]
    %61 = vrot.lane.b32.xlu0 %v60, 48
    %v62 = vpop.permute.xlu0 %61
    %vm63 = vcmask 458112
    %64 = vst.msk [vmem:[#allocation0] sm:$0x1] %vm63, %v62
    %s65 = scalar_lea.vmem %s0, 5
    %v66 = vld [vmem:[%s65] sm:$0x1]
    %67 = vrot.lane.b32.xlu0 %v66, 40
    %v68 = vpop.permute.xlu0 %67
    %vm69 = vcmask 392512
    %70 = vst.msk [vmem:[#allocation0] sm:$0x1] %vm69, %v68
    %s71 = scalar_lea.vmem %s0, 4
    %v72 = vld [vmem:[%s71] sm:$0x1]
    %73 = vrot.lane.b32.xlu0 %v72, 32
    %v74 = vpop.permute.xlu0 %73
    %vm75 = vcmask 326912
    %76 = vst.msk [vmem:[#allocation0] sm:$0x1] %vm75, %v74
    %s77 = scalar_lea.vmem %s0, 3
    %v78 = vld [vmem:[%s77] sm:$0x1]
    %79 = vrot.lane.b32.xlu0 %v78, 24
    %v80 = vpop.permute.xlu0 %79
    %vm81 = vcmask 261312
    %82 = vst.msk [vmem:[#allocation0] sm:$0x1] %vm81, %v80
    %s83 = scalar_lea.vmem %s0, 2
    %v84 = vld [vmem:[%s83] sm:$0x1]
    %85 = vrot.lane.b32.xlu0 %v84, 16
    %v86 = vpop.permute.xlu0 %85
    %vm87 = vcmask 195712
    %88 = vst.msk [vmem:[#allocation0] sm:$0x1] %vm87, %v86
    %s89 = scalar_lea.vmem %s0, 1
    %v90 = vld [vmem:[%s89] sm:$0x1]
    %91 = vrot.lane.b32.xlu0 %v90, 8
    %v92 = vpop.permute.xlu0 %91
    %vm93 = vcmask 130112
    %94 = vst.msk [vmem:[#allocation0] sm:$0x1] %vm93, %v92
    %s96 = sshll.u32 1, 1
    %s97 = ssub.s32 %s96, 1
    %v99 = vld [vmem:[#allocation0] sm:%s97]
    %s100 = sshll.u32 1, 1
    %s101 = ssub.s32 %s100, 1
    %102 = vst [vmem:[%s1] sm:%s101] %v99

// kernel: basic_block_3d.3
$region0: #{basic_block_3d.3}
  #allocation0 [shape = 'u32[]', space=smem, size = 0x4, offset = 0x4, fixed_abs, tag = 'smem constant byte address 0x4 - core index']
  #allocation1 [shape = 'u32[144,128]{1,0:T(1,128)}', space=vmem, size = 0x12000, scoped, tag = 'internal scratch']
  %s0 = inlined_call_operand.vmem [shape: f32[128,128], index: 0, kind: input, shape index: {}]
  %s1 = inlined_call_operand.vmem [shape: f32[3,128,128], index: 1, kind: input, shape index: {}]
  %s2 = inlined_call_operand.vmem [shape: f32[1,128], index: 2, kind: input, shape index: {}]
  %s3 = inlined_call_operand.vmem [shape: f32[1,128], index: 3, kind: input, shape index: {}]
  %s4 = inlined_call_operand.vmem [shape: f32[1,128], index: 4, kind: input, shape index: {}]
  %s5 = inlined_call_operand.vmem [shape: f32[128,128], index: 5, kind: output, shape index: {0}]
  %s6 = inlined_call_operand.vmem [shape: f32[2,2,128], index: 6, kind: output, shape index: {1}]
  %7 = xla_tuple %s5, %s6
  %s8 = sld [smem:[#allocation0]]
  $region61: #{basic_block_3d.3} parent=0
    _
  %s10 = ssub.s32 1, %s8
  %s11 = scalar_select 0, %s10, %s8
  loop: start=0, step=1, limit=4
  $region2: #{basic_block_3d.3} parent=0 // loop_pre_header
    _
  $region3: #{basic_block_3d.3} parent=0 // loop_header
    %s13 = sphi 0, %s17
    %p14 = scmp.ge.s32.totalorder %s13, 4
    %s23 = sphi 0, %s25
    %s26 = sphi 0, %s23
    %s27 = sphi 0, %s26
    %s43 = sphi 0, %s27
    %s47 = sphi 0, %s47
    %s49 = sphi 0, %s47
    %s50 = sphi 0, %s49
    %s64 = sphi 0, %s50
    %s68 = sphi 0, %s68
    %s70 = sphi 0, %s68
    %s71 = sphi 0, %s70
    %s85 = sphi 0, %s71
    %s89 = sphi 0, %s89
    %s91 = sphi 0, %s89
    %s92 = sphi 0, %s91
    %s106 = sphi 0, %s92
    %s110 = sphi 0, %s110
    %s112 = sphi 0, %s110
    %s113 = sphi 0, %s112
    %s127 = sphi 0, %s113
    %s133 = sphi 0, %s135
    %s136 = sphi 0, %s133
    %s137 = sphi 0, %s136
    %s153 = sphi 0, %s137
    %s159 = sphi 0, %s161
    %s162 = sphi 0, %s159
    %s163 = sphi 0, %s162
    %s179 = sphi 0, %s163
  $region4: #{basic_block_3d.3} parent=0 // loop_header_branch
    %16 = sbr.rel (%p14) target = $region8
  $region5: #{basic_block_3d.3} parent=0 // loop_body
    %s18 = ssub.s32 %s13, 1
    %s19 = ssub.s32 %s13, 2
    %s20 = sadd.s32 %s13, 1
    %s21 = ssub.s32 %s13, %s20
    %p22 = scmp.eq.s32.totalorder %s21, 0
    %s24 = sadd.s32 %s23, 1
    %s25 = scalar_select %p22, %s23, %s24
    %p28 = pneg %p22
    %p29 = scmp.eq.s32.totalorder %s13, 1
    %p30 = por %p28, %p29
    %p31 = scmp.ne.s32.totalorder %s23, %s26
    %p32 = scmp.eq.s32.totalorder %s13, 0
    %p33 = por %p31, %p32
    %p34 = scmp.ne.s32.totalorder %s23, %s26
    %p35 = scmp.eq.s32.totalorder %s18, 1
    %p36 = por %p34, %p35
    %p37 = scmp.ne.s32.totalorder %s26, %s27
    %p38 = scmp.eq.s32.totalorder %s18, 0
    %p39 = por %p37, %p38
    %p40 = scmp.ne.s32.totalorder %s26, %s27
    %p41 = scmp.eq.s32.totalorder %s19, 1
    %p42 = por %p40, %p41
    %p44 = scmp.ne.s32.totalorder %s27, %s43
    %p45 = scmp.eq.s32.totalorder %s19, 0
    %p46 = por %p44, %p45
    %s48 = sadd.s32 %s47, 1
    %p51 = scmp.eq.s32.totalorder %s13, 1
    %p52 = scmp.ne.s32.totalorder %s47, %s49
    %p53 = scmp.eq.s32.totalorder %s13, 0
    %p54 = por %p52, %p53
    %p55 = scmp.ne.s32.totalorder %s47, %s49
    %p56 = scmp.eq.s32.totalorder %s18, 1
    %p57 = por %p55, %p56
    %p58 = scmp.ne.s32.totalorder %s49, %s50
    %p59 = scmp.eq.s32.totalorder %s18, 0
    %p60 = por %p58, %p59
    %p61 = scmp.ne.s32.totalorder %s49, %s50
    %p62 = scmp.eq.s32.totalorder %s19, 1
    %p63 = por %p61, %p62
    %p65 = scmp.ne.s32.totalorder %s50, %s64
    %p66 = scmp.eq.s32.totalorder %s19, 0
    %p67 = por %p65, %p66
    %s69 = sadd.s32 %s68, 1
    %p72 = scmp.eq.s32.totalorder %s13, 1
    %p73 = scmp.ne.s32.totalorder %s68, %s70
    %p74 = scmp.eq.s32.totalorder %s13, 0
    %p75 = por %p73, %p74
    %p76 = scmp.ne.s32.totalorder %s68, %s70
    %p77 = scmp.eq.s32.totalorder %s18, 1
    %p78 = por %p76, %p77
    %p79 = scmp.ne.s32.totalorder %s70, %s71
    %p80 = scmp.eq.s32.totalorder %s18, 0
    %p81 = por %p79, %p80
    %p82 = scmp.ne.s32.totalorder %s70, %s71
    %p83 = scmp.eq.s32.totalorder %s19, 1
    %p84 = por %p82, %p83
    %p86 = scmp.ne.s32.totalorder %s71, %s85
    %p87 = scmp.eq.s32.totalorder %s19, 0
    %p88 = por %p86, %p87
    %s90 = sadd.s32 %s89, 1
    %p93 = scmp.eq.s32.totalorder %s13, 1
    %p94 = scmp.ne.s32.totalorder %s89, %s91
    %p95 = scmp.eq.s32.totalorder %s13, 0
    %p96 = por %p94, %p95
    %p97 = scmp.ne.s32.totalorder %s89, %s91
    %p98 = scmp.eq.s32.totalorder %s18, 1
    %p99 = por %p97, %p98
    %p100 = scmp.ne.s32.totalorder %s91, %s92
    %p101 = scmp.eq.s32.totalorder %s18, 0
    %p102 = por %p100, %p101
    %p103 = scmp.ne.s32.totalorder %s91, %s92
    %p104 = scmp.eq.s32.totalorder %s19, 1
    %p105 = por %p103, %p104
    %p107 = scmp.ne.s32.totalorder %s92, %s106
    %p108 = scmp.eq.s32.totalorder %s19, 0
    %p109 = por %p107, %p108
    %s111 = sadd.s32 %s110, 1
    %p114 = scmp.eq.s32.totalorder %s13, 1
    %p115 = scmp.ne.s32.totalorder %s110, %s112
    %p116 = scmp.eq.s32.totalorder %s13, 0
    %p117 = por %p115, %p116
    %p118 = scmp.ne.s32.totalorder %s110, %s112
    %p119 = scmp.eq.s32.totalorder %s18, 1
    %p120 = por %p118, %p119
    %p121 = scmp.ne.s32.totalorder %s112, %s113
    %p122 = scmp.eq.s32.totalorder %s18, 0
    %p123 = por %p121, %p122
    %p124 = scmp.ne.s32.totalorder %s112, %s113
    %p125 = scmp.eq.s32.totalorder %s19, 1
    %p126 = por %p124, %p125
    %p128 = scmp.ne.s32.totalorder %s113, %s127
    %p129 = scmp.eq.s32.totalorder %s19, 0
    %p130 = por %p128, %p129
    %s131 = ssub.s32 %s13, %s20
    %p132 = scmp.eq.s32.totalorder %s131, 0
    %s134 = sadd.s32 %s133, 1
    %s135 = scalar_select %p132, %s133, %s134
    %p138 = pneg %p132
    %p139 = scmp.eq.s32.totalorder %s13, 1
    %p140 = por %p138, %p139
    %p141 = scmp.ne.s32.totalorder %s133, %s136
    %p142 = scmp.eq.s32.totalorder %s13, 0
    %p143 = por %p141, %p142
    %p144 = scmp.ne.s32.totalorder %s133, %s136
    %p145 = scmp.eq.s32.totalorder %s18, 1
    %p146 = por %p144, %p145
    %p147 = scmp.ne.s32.totalorder %s136, %s137
    %p148 = scmp.eq.s32.totalorder %s18, 0
    %p149 = por %p147, %p148
    %p150 = scmp.ne.s32.totalorder %s136, %s137
    %p151 = scmp.eq.s32.totalorder %s19, 1
    %p152 = por %p150, %p151
    %p154 = scmp.ne.s32.totalorder %s137, %s153
    %p155 = scmp.eq.s32.totalorder %s19, 0
    %p156 = por %p154, %p155
    %s157 = ssub.s32 %s13, %s20
    %p158 = scmp.eq.s32.totalorder %s157, 0
    %s160 = sadd.s32 %s159, 1
    %s161 = scalar_select %p158, %s159, %s160
    %p164 = pneg %p158
    %p165 = scmp.eq.s32.totalorder %s13, 1
    %p166 = por %p164, %p165
    %p167 = scmp.ne.s32.totalorder %s159, %s162
    %p168 = scmp.eq.s32.totalorder %s13, 0
    %p169 = por %p167, %p168
    %p170 = scmp.ne.s32.totalorder %s159, %s162
    %p171 = scmp.eq.s32.totalorder %s18, 1
    %p172 = por %p170, %p171
    %p173 = scmp.ne.s32.totalorder %s162, %s163
    %p174 = scmp.eq.s32.totalorder %s18, 0
    %p175 = por %p173, %p174
    %p176 = scmp.ne.s32.totalorder %s162, %s163
    %p177 = scmp.eq.s32.totalorder %s19, 1
    %p178 = por %p176, %p177
    %p180 = scmp.ne.s32.totalorder %s163, %s179
    %p181 = scmp.eq.s32.totalorder %s19, 0
    %p182 = por %p180, %p181
    %p183 = scmp.le.s32.totalorder 1, %s13
    %p184 = scmp.lt.s32.totalorder %s13, 3
    %p185 = pnand %p183, %p184
    %p186 = pneg %p185
    // Predicated region
    $region9: #{basic_block_3d.3} parent=5 // pred_check
      _
    $region10: #{basic_block_3d.3} parent=5 // pred_check_branch
      %188 = sbr.rel (%p185) target = $region12
    $region11: #{basic_block_3d.3} parent=5 // pred_region
      %s189 = ssub.s32 %s13, 1
      // Predicated region
      $region13: #{basic_block_3d.3} parent=11 // pred_check
        %p190 = pneg %p60
      $region14: #{basic_block_3d.3} parent=11 // pred_check_branch
        %192 = sbr.rel (%p190) target = $region16
      $region15: #{basic_block_3d.3} parent=11 // pred_region
        _
      $region16: #{basic_block_3d.3} parent=11 // pred_fallthru
        _
      // Predicated region
      $region17: #{basic_block_3d.3} parent=11 // pred_check
        %p193 = pneg %p81
      $region18: #{basic_block_3d.3} parent=11 // pred_check_branch
        %195 = sbr.rel (%p193) target = $region20
      $region19: #{basic_block_3d.3} parent=11 // pred_region
        _
      $region20: #{basic_block_3d.3} parent=11 // pred_fallthru
        _
      // Predicated region
      $region21: #{basic_block_3d.3} parent=11 // pred_check
        %p196 = pneg %p102
      $region22: #{basic_block_3d.3} parent=11 // pred_check_branch
        %198 = sbr.rel (%p196) target = $region24
      $region23: #{basic_block_3d.3} parent=11 // pred_region
        _
      $region24: #{basic_block_3d.3} parent=11 // pred_fallthru
        _
      // Predicated region
      $region25: #{basic_block_3d.3} parent=11 // pred_check
        %p199 = pneg %p123
      $region26: #{basic_block_3d.3} parent=11 // pred_check_branch
        %201 = sbr.rel (%p199) target = $region28
      $region27: #{basic_block_3d.3} parent=11 // pred_region
        _
      $region28: #{basic_block_3d.3} parent=11 // pred_fallthru
        _
    $region12: #{basic_block_3d.3} parent=5 // pred_fallthru
      _
    %p202 = scmp.lt.s32.totalorder %s13, 2
    // Predicated region
    $region29: #{basic_block_3d.3} parent=5 // pred_check
      %p203 = pneg %p202
    $region30: #{basic_block_3d.3} parent=5 // pred_check_branch
      %205 = sbr.rel (%p203) target = $region32
    $region31: #{basic_block_3d.3} parent=5 // pred_region
      // Predicated region
      $region33: #{basic_block_3d.3} parent=31 // pred_check
        %p206 = pneg %p33
      $region34: #{basic_block_3d.3} parent=31 // pred_check_branch
        %208 = sbr.rel (%p206) target = $region36
      $region35: #{basic_block_3d.3} parent=31 // pred_region
        %s209 = smul.u32 8, %s13
        %p210 = scmp.lt.s32.totalorder %s209, 15
        %s211 = scalar_select %p210, %s209, 15
        %s212 = smul.addr %s211, 8
        %s213 = scalar_lea.vmem %s0, %s212
        %s214 = smul.u32 8, %s13
      $region36: #{basic_block_3d.3} parent=31 // pred_fallthru
        _
    $region32: #{basic_block_3d.3} parent=5 // pred_fallthru
      _
    %p215 = scmp.le.s32.totalorder 1, %s13
    %p216 = scmp.lt.s32.totalorder %s13, 3
    %p217 = pnand %p215, %p216
    %p218 = pneg %p217
    // Predicated region
    $region37: #{basic_block_3d.3} parent=5 // pred_check
      _
    $region38: #{basic_block_3d.3} parent=5 // pred_check_branch
      %220 = sbr.rel (%p217) target = $region40
    $region39: #{basic_block_3d.3} parent=5 // pred_region
      %s221 = ssub.s32 %s13, 1
      %s222 = smul.u32 8, %s18
      %p223 = scmp.lt.s32.totalorder %s222, 15
      %s224 = scalar_select %p223, %s222, 15
      %s225 = smul.addr %s224, 8
      %s226 = scalar_lea.vmem %s0, %s225
      %p227 = pneg %p39
      %p228 = pneg %p36
      %p229 = pneg %p60
      %p230 = pneg %p57
      %p231 = pneg %p81
      %p232 = pneg %p78
      %p233 = pneg %p102
      %p234 = pneg %p99
      %p235 = pneg %p123
      %p236 = pneg %p120
      %p237 = pneg %p149
      %p238 = pneg %p146
      %s239 = smul.u32 8, %s18
      %p240 = scmp.lt.s32.totalorder %s239, 15
      %s241 = scalar_select %p240, %s239, 15
      %s242 = smul.addr %s241, 8
      %s243 = scalar_lea.vmem %s5, %s242
      %p244 = pneg %p175
      %p245 = pneg %p172
      %p246 = scmp.lt.s32.totalorder %s18, 1
      %s247 = scalar_select %p246, %s18, 1
      %s248 = smul.addr %s247, 2
      %s249 = scalar_lea.vmem %s6, %s248
      %s250 = smul.u32 8, %s18
      %p251 = scmp.lt.s32.totalorder %s250, 15
      %s252 = scalar_select %p251, %s250, 15
      %s253 = smul.addr %s252, 8
      %s254 = scalar_lea.vmem %s0, %s253
      %s255 = smul.u32 8, %s18
      %s256 = smul.u32 8, %s18
      %p257 = scmp.lt.s32.totalorder %s256, 15
      %s258 = scalar_select %p257, %s256, 15
      %s259 = smul.addr %s258, 8
      %s260 = scalar_lea.vmem %s5, %s259
      %s261 = smul.u32 8, %s18
      %p262 = scmp.lt.s32.totalorder %s18, 1
      %s263 = scalar_select %p262, %s18, 1
      %s264 = smul.addr %s263, 2
      %s265 = scalar_lea.vmem %s6, %s264
      %v266 = vld [vmem:[%s254] sm:$0xff]
      %v267 = vld [vmem:[%s254 + $0x8] sm:$0xff]
      %v268 = vld [vmem:[%s254 + $0x10] sm:$0xff]
      %v269 = vld [vmem:[%s254 + $0x18] sm:$0xff]
      %v270 = vld [vmem:[%s254 + $0x20] sm:$0xff]
      %v271 = vld [vmem:[%s254 + $0x28] sm:$0xff]
      %v272 = vld [vmem:[%s254 + $0x30] sm:$0xff]
      %v273 = vld [vmem:[%s254 + $0x38] sm:$0xff]
      %v274 = vlaneseq
      %v275 = vshrl.u32 %v274, 7
      %v276 = vadd.s32 %v275, 8
      %v277 = vadd.s32 %v275, 16
      %v278 = vadd.s32 %v275, 24
      %v279 = vadd.s32 %v275, 32
      %v280 = vadd.s32 %v275, 40
      %v281 = vadd.s32 %v275, 48
      %v282 = vadd.s32 %v275, 56
      %v283 = vand.u32 %v275, 15
      %v284 = vand.u32 %v276, 15
      %v285 = vand.u32 %v277, 15
      %v286 = vand.u32 %v278, 15
      %v287 = vand.u32 %v279, 15
      %v288 = vand.u32 %v280, 15
      %v289 = vand.u32 %v281, 15
      %v290 = vand.u32 %v282, 15
      %vm291 = vcmp.eq.s32.totalorder %v283, 0
      %vm292 = vcmp.eq.s32.totalorder %v284, 0
      %vm293 = vcmp.eq.s32.totalorder %v285, 0
      %vm294 = vcmp.eq.s32.totalorder %v286, 0
      %vm295 = vcmp.eq.s32.totalorder %v287, 0
      %vm296 = vcmp.eq.s32.totalorder %v288, 0
      %vm297 = vcmp.eq.s32.totalorder %v289, 0
      %vm298 = vcmp.eq.s32.totalorder %v290, 0
      %v299 = vrot.slane %v266, 7
      %v300 = vrot.slane %v267, 7
      %v301 = vrot.slane %v268, 7
      %v302 = vrot.slane %v269, 7
      %v303 = vrot.slane %v270, 7
      %v304 = vrot.slane %v271, 7
      %v305 = vrot.slane %v272, 7
      %v306 = vrot.slane %v273, 7
      %vm307 = vcmp.lt.s32.totalorder %v275, 1
      %v308 = vsel %vm307, %v305, %v306
      %v309 = vsel %vm307, %v304, %v305
      %v310 = vsel %vm307, %v303, %v304
      %v311 = vsel %vm307, %v302, %v303
      %v312 = vsel %vm307, %v301, %v302
      %v313 = vsel %vm307, %v300, %v301
      %v314 = vsel %vm307, %v299, %v300
      %v315 = vsel %vm307, %v306, %v299
      %v316 = vsel %vm291, 0.0, %v315
      %v317 = vsel %vm292, 0.0, %v314
      %v318 = vsel %vm293, 0.0, %v313
      %v319 = vsel %vm294, 0.0, %v312
      %v320 = vsel %vm295, 0.0, %v311
      %v321 = vsel %vm296, 0.0, %v310
      %v322 = vsel %vm297, 0.0, %v309
      %v323 = vsel %vm298, 0.0, %v308
      %vm324 = vcmp.eq.s32.totalorder %v283, 15
      %vm325 = vcmp.eq.s32.totalorder %v284, 15
      %vm326 = vcmp.eq.s32.totalorder %v285, 15
      %vm327 = vcmp.eq.s32.totalorder %v286, 15
      %vm328 = vcmp.eq.s32.totalorder %v287, 15
      %vm329 = vcmp.eq.s32.totalorder %v288, 15
      %vm330 = vcmp.eq.s32.totalorder %v289, 15
      %vm331 = vcmp.eq.s32.totalorder %v290, 15
      %v332 = vrot.slane %v266, 1
      %v333 = vrot.slane %v267, 1
      %v334 = vrot.slane %v268, 1
      %v335 = vrot.slane %v269, 1
      %v336 = vrot.slane %v270, 1
      %v337 = vrot.slane %v271, 1
      %v338 = vrot.slane %v272, 1
      %v339 = vrot.slane %v273, 1
      %vm340 = vcmp.lt.s32.totalorder %v275, 7
      %v341 = vsel %vm340, %v338, %v339
      %v342 = vsel %vm340, %v337, %v338
      %v343 = vsel %vm340, %v336, %v337
      %v344 = vsel %vm340, %v335, %v336
      %v345 = vsel %vm340, %v334, %v335
      %v346 = vsel %vm340, %v333, %v334
      %v347 = vsel %vm340, %v332, %v333
      %v348 = vsel %vm340, %v339, %v332
      %v349 = vsel %vm324, 0.0, %v347
      %v350 = vsel %vm325, 0.0, %v346
      %v351 = vsel %vm326, 0.0, %v345
      %v352 = vsel %vm327, 0.0, %v344
      %v353 = vsel %vm328, 0.0, %v343
      %v354 = vsel %vm329, 0.0, %v342
      %v355 = vsel %vm330, 0.0, %v341
      %v356 = vsel %vm331, 0.0, %v348
      %v357 = vld [vmem:[%s1] sm:$0xff]
      %v358 = vld [vmem:[%s1 + $0x8] sm:$0xff]
      %v359 = vld [vmem:[%s1 + $0x10] sm:$0xff]
      %v360 = vld [vmem:[%s1 + $0x18] sm:$0xff]
      %v361 = vld [vmem:[%s1 + $0x20] sm:$0xff]
      %v362 = vld [vmem:[%s1 + $0x28] sm:$0xff]
      %v363 = vld [vmem:[%s1 + $0x30] sm:$0xff]
      %v364 = vld [vmem:[%s1 + $0x38] sm:$0xff]
      %v365 = vld [vmem:[%s1 + $0x40] sm:$0xff]
      %v366 = vld [vmem:[%s1 + $0x48] sm:$0xff]
      %v367 = vld [vmem:[%s1 + $0x50] sm:$0xff]
      %v368 = vld [vmem:[%s1 + $0x58] sm:$0xff]
      %v369 = vld [vmem:[%s1 + $0x60] sm:$0xff]
      %v370 = vld [vmem:[%s1 + $0x68] sm:$0xff]
      %v371 = vld [vmem:[%s1 + $0x70] sm:$0xff]
      %v372 = vld [vmem:[%s1 + $0x78] sm:$0xff]
      %s373 = scalar_lea.vmem %s1, 128
      %v374 = vld [vmem:[%s373] sm:$0xff]
      %v375 = vld [vmem:[%s373 + $0x8] sm:$0xff]
      %v376 = vld [vmem:[%s373 + $0x10] sm:$0xff]
      %v377 = vld [vmem:[%s373 + $0x18] sm:$0xff]
      %v378 = vld [vmem:[%s373 + $0x20] sm:$0xff]
      %v379 = vld [vmem:[%s373 + $0x28] sm:$0xff]
      %v380 = vld [vmem:[%s373 + $0x30] sm:$0xff]
      %v381 = vld [vmem:[%s373 + $0x38] sm:$0xff]
      %v382 = vld [vmem:[%s373 + $0x40] sm:$0xff]
      %v383 = vld [vmem:[%s373 + $0x48] sm:$0xff]
      %v384 = vld [vmem:[%s373 + $0x50] sm:$0xff]
      %v385 = vld [vmem:[%s373 + $0x58] sm:$0xff]
      %v386 = vld [vmem:[%s373 + $0x60] sm:$0xff]
      %v387 = vld [vmem:[%s373 + $0x68] sm:$0xff]
      %v388 = vld [vmem:[%s373 + $0x70] sm:$0xff]
      %v389 = vld [vmem:[%s373 + $0x78] sm:$0xff]
      %390 = vmatprep.subr.mxu0 0.0
      %391 = vmatpush1.msra.mxu0 %v389
      %392 = vmatprep.subr.mxu0 0.0
      %393 = vmatpush1.msra.mxu0 %v388
      %394 = vmatprep.subr.mxu0 0.0
      %395 = vmatpush1.msra.mxu0 %v387
      %396 = vmatprep.subr.mxu0 0.0
      %397 = vmatpush1.msra.mxu0 %v386
      %398 = vmatprep.subr.mxu0 0.0
      %399 = vmatpush1.msra.mxu0 %v385
      %400 = vmatprep.subr.mxu0 0.0
      %401 = vmatpush1.msra.mxu0 %v384
      %402 = vmatprep.subr.mxu0 0.0
      %403 = vmatpush1.msra.mxu0 %v383
      %404 = vmatprep.subr.mxu0 0.0
      %405 = vmatpush1.msra.mxu0 %v382
      %406 = vmatprep.subr.mxu0 0.0
      %407 = vmatpush1.msra.mxu0 %v381
      %408 = vmatprep.subr.mxu0 0.0
      %409 = vmatpush1.msra.mxu0 %v380
      %410 = vmatprep.subr.mxu0 0.0
      %411 = vmatpush1.msra.mxu0 %v379
      %412 = vmatprep.subr.mxu0 0.0
      %413 = vmatpush1.msra.mxu0 %v378
      %414 = vmatprep.subr.mxu0 0.0
      %415 = vmatpush1.msra.mxu0 %v377
      %416 = vmatprep.subr.mxu0 0.0
      %417 = vmatpush1.msra.mxu0 %v376
      %418 = vmatprep.subr.mxu0 0.0
      %419 = vmatpush1.msra.mxu0 %v375
      %420 = vmatprep.subr.mxu0 0.0
      %421 = vmatpush1.msra.mxu0 %v374
      %422 = vmatprep.subr.mxu0 0.0
      %423 = vmatpush2.msra.mxu0 0.0
      %424 = vmatprep.subr.mxu0 0.0
      %425 = vmatpush2.msra.mxu0 0.0
      %426 = vmatprep.subr.mxu0 0.0
      %427 = vmatpush2.msra.mxu0 0.0
      %428 = vmatprep.subr.mxu0 0.0
      %429 = vmatpush2.msra.mxu0 0.0
      %430 = vmatprep.subr.mxu0 0.0
      %431 = vmatpush2.msra.mxu0 0.0
      %432 = vmatprep.subr.mxu0 0.0
      %433 = vmatpush2.msra.mxu0 0.0
      %434 = vmatprep.subr.mxu0 0.0
      %435 = vmatpush2.msra.mxu0 0.0
      %436 = vmatprep.subr.mxu0 0.0
      %437 = vmatpush2.msra.mxu0 0.0
      %438 = vmatprep.subr.mxu0 0.0
      %439 = vmatpush2.msra.mxu0 0.0
      %440 = vmatprep.subr.mxu0 0.0
      %441 = vmatpush2.msra.mxu0 0.0
      %442 = vmatprep.subr.mxu0 0.0
      %443 = vmatpush2.msra.mxu0 0.0
      %444 = vmatprep.subr.mxu0 0.0
      %445 = vmatpush2.msra.mxu0 0.0
      %446 = vmatprep.subr.mxu0 0.0
      %447 = vmatpush2.msra.mxu0 0.0
      %448 = vmatprep.subr.mxu0 0.0
      %449 = vmatpush2.msra.mxu0 0.0
      %450 = vmatprep.subr.mxu0 0.0
      %451 = vmatpush2.msra.mxu0 0.0
      %452 = vmatprep.subr.mxu0 0.0
      %453 = vmatpush2.msra.mxu0 0.0
      %454 = vmatprep.mubr.f32.mxu0 0.0
      %455 = vmatmul.mubr.f32.gmra.mxu0 %v266
      %v456 = vpop.f32.mrf.mxu0
      %v457 = vadd.f32 0.0, %v456
      %v458 = vpop.f32.mrf.mxu0
      %459 = vmatprep.mubr.f32.mxu0 0.0
      %460 = vmatmul.mubr.f32.gmra.mxu0 %v267
      %v461 = vpop.f32.mrf.mxu0
      %v462 = vadd.f32 0.0, %v461
      %v463 = vpop.f32.mrf.mxu0
      %464 = vmatprep.mubr.f32.mxu0 0.0
      %465 = vmatmul.mubr.f32.gmra.mxu0 %v268
      %v466 = vpop.f32.mrf.mxu0
      %v467 = vadd.f32 0.0, %v466
      %v468 = vpop.f32.mrf.mxu0
      %469 = vmatprep.mubr.f32.mxu0 0.0
      %470 = vmatmul.mubr.f32.gmra.mxu0 %v269
      %v471 = vpop.f32.mrf.mxu0
      %v472 = vadd.f32 0.0, %v471
      %v473 = vpop.f32.mrf.mxu0
      %474 = vmatprep.mubr.f32.mxu0 0.0
      %475 = vmatmul.mubr.f32.gmra.mxu0 %v270
      %v476 = vpop.f32.mrf.mxu0
      %v477 = vadd.f32 0.0, %v476
      %v478 = vpop.f32.mrf.mxu0
      %479 = vmatprep.mubr.f32.mxu0 0.0
      %480 = vmatmul.mubr.f32.gmra.mxu0 %v271
      %v481 = vpop.f32.mrf.mxu0
      %v482 = vadd.f32 0.0, %v481
      %v483 = vpop.f32.mrf.mxu0
      %484 = vmatprep.mubr.f32.mxu0 0.0
      %485 = vmatmul.mubr.f32.gmra.mxu0 %v272
      %v486 = vpop.f32.mrf.mxu0
      %v487 = vadd.f32 0.0, %v486
      %v488 = vpop.f32.mrf.mxu0
      %489 = vmatprep.mubr.f32.mxu0 0.0
      %490 = vmatmul.mubr.f32.gmra.mxu0 %v273
      %v491 = vpop.f32.mrf.mxu0
      %v492 = vadd.f32 0.0, %v491
      %v493 = vpop.f32.mrf.mxu0
      %494 = vdwg.mxu0
      %495 = vmatprep.subr.mxu0 0.0
      %496 = vmatpush1.msra.mxu0 %v372
      %497 = vmatprep.subr.mxu0 0.0
      %498 = vmatpush1.msra.mxu0 %v371
      %499 = vmatprep.subr.mxu0 0.0
      %500 = vmatpush1.msra.mxu0 %v370
      %501 = vmatprep.subr.mxu0 0.0
      %502 = vmatpush1.msra.mxu0 %v369
      %503 = vmatprep.subr.mxu0 0.0
      %504 = vmatpush1.msra.mxu0 %v368
      %505 = vmatprep.subr.mxu0 0.0
      %506 = vmatpush1.msra.mxu0 %v367
      %507 = vmatprep.subr.mxu0 0.0
      %508 = vmatpush1.msra.mxu0 %v366
      %509 = vmatprep.subr.mxu0 0.0
      %510 = vmatpush1.msra.mxu0 %v365
      %511 = vmatprep.subr.mxu0 0.0
      %512 = vmatpush1.msra.mxu0 %v364
      %513 = vmatprep.subr.mxu0 0.0
      %514 = vmatpush1.msra.mxu0 %v363
      %515 = vmatprep.subr.mxu0 0.0
      %516 = vmatpush1.msra.mxu0 %v362
      %517 = vmatprep.subr.mxu0 0.0
      %518 = vmatpush1.msra.mxu0 %v361
      %519 = vmatprep.subr.mxu0 0.0
      %520 = vmatpush1.msra.mxu0 %v360
      %521 = vmatprep.subr.mxu0 0.0
      %522 = vmatpush1.msra.mxu0 %v359
      %523 = vmatprep.subr.mxu0 0.0
      %524 = vmatpush1.msra.mxu0 %v358
      %525 = vmatprep.subr.mxu0 0.0
      %526 = vmatpush1.msra.mxu0 %v357
      %527 = vmatprep.subr.mxu0 0.0
      %528 = vmatpush2.msra.mxu0 0.0
      %529 = vmatprep.subr.mxu0 0.0
      %530 = vmatpush2.msra.mxu0 0.0
      %531 = vmatprep.subr.mxu0 0.0
      %532 = vmatpush2.msra.mxu0 0.0
      %533 = vmatprep.subr.mxu0 0.0
      %534 = vmatpush2.msra.mxu0 0.0
      %535 = vmatprep.subr.mxu0 0.0
      %536 = vmatpush2.msra.mxu0 0.0
      %537 = vmatprep.subr.mxu0 0.0
      %538 = vmatpush2.msra.mxu0 0.0
      %539 = vmatprep.subr.mxu0 0.0
      %540 = vmatpush2.msra.mxu0 0.0
      %541 = vmatprep.subr.mxu0 0.0
      %542 = vmatpush2.msra.mxu0 0.0
      %543 = vmatprep.subr.mxu0 0.0
      %544 = vmatpush2.msra.mxu0 0.0
      %545 = vmatprep.subr.mxu0 0.0
      %546 = vmatpush2.msra.mxu0 0.0
      %547 = vmatprep.subr.mxu0 0.0
      %548 = vmatpush2.msra.mxu0 0.0
      %549 = vmatprep.subr.mxu0 0.0
      %550 = vmatpush2.msra.mxu0 0.0
      %551 = vmatprep.subr.mxu0 0.0
      %552 = vmatpush2.msra.mxu0 0.0
      %553 = vmatprep.subr.mxu0 0.0
      %554 = vmatpush2.msra.mxu0 0.0
      %555 = vmatprep.subr.mxu0 0.0
      %556 = vmatpush2.msra.mxu0 0.0
      %557 = vmatprep.subr.mxu0 0.0
      %558 = vmatpush2.msra.mxu0 0.0
      %559 = vmatprep.mubr.f32.mxu0 0.0
      %560 = vmatmul.mubr.f32.gmra.mxu0 %v316
      %v561 = vpop.f32.mrf.mxu0
      %v562 = vadd.f32 %v457, %v561
      %v563 = vpop.f32.mrf.mxu0
      %564 = vmatprep.mubr.f32.mxu0 0.0
      %565 = vmatmul.mubr.f32.gmra.mxu0 %v317
      %v566 = vpop.f32.mrf.mxu0
      %v567 = vadd.f32 %v462, %v566
      %v568 = vpop.f32.mrf.mxu0
      %569 = vmatprep.mubr.f32.mxu0 0.0
      %570 = vmatmul.mubr.f32.gmra.mxu0 %v318
      %v571 = vpop.f32.mrf.mxu0
      %v572 = vadd.f32 %v467, %v571
      %v573 = vpop.f32.mrf.mxu0
      %574 = vmatprep.mubr.f32.mxu0 0.0
      %575 = vmatmul.mubr.f32.gmra.mxu0 %v319
      %v576 = vpop.f32.mrf.mxu0
      %v577 = vadd.f32 %v472, %v576
      %v578 = vpop.f32.mrf.mxu0
      %579 = vmatprep.mubr.f32.mxu0 0.0
      %580 = vmatmul.mubr.f32.gmra.mxu0 %v320
      %v581 = vpop.f32.mrf.mxu0
      %v582 = vadd.f32 %v477, %v581
      %v583 = vpop.f32.mrf.mxu0
      %584 = vmatprep.mubr.f32.mxu0 0.0
      %585 = vmatmul.mubr.f32.gmra.mxu0 %v321
      %v586 = vpop.f32.mrf.mxu0
      %v587 = vadd.f32 %v482, %v586
      %v588 = vpop.f32.mrf.mxu0
      %589 = vmatprep.mubr.f32.mxu0 0.0
      %590 = vmatmul.mubr.f32.gmra.mxu0 %v322
      %v591 = vpop.f32.mrf.mxu0
      %v592 = vadd.f32 %v487, %v591
      %v593 = vpop.f32.mrf.mxu0
      %594 = vmatprep.mubr.f32.mxu0 0.0
      %595 = vmatmul.mubr.f32.gmra.mxu0 %v323
      %v596 = vpop.f32.mrf.mxu0
      %v597 = vadd.f32 %v492, %v596
      %v598 = vpop.f32.mrf.mxu0
      %599 = vdwg.mxu0
      %s600 = scalar_lea.vmem %s1, 256
      %v601 = vld [vmem:[%s600] sm:$0xff]
      %v602 = vld [vmem:[%s600 + $0x8] sm:$0xff]
      %v603 = vld [vmem:[%s600 + $0x10] sm:$0xff]
      %v604 = vld [vmem:[%s600 + $0x18] sm:$0xff]
      %v605 = vld [vmem:[%s600 + $0x20] sm:$0xff]
      %v606 = vld [vmem:[%s600 + $0x28] sm:$0xff]
      %v607 = vld [vmem:[%s600 + $0x30] sm:$0xff]
      %v608 = vld [vmem:[%s600 + $0x38] sm:$0xff]
      %v609 = vld [vmem:[%s600 + $0x40] sm:$0xff]
      %v610 = vld [vmem:[%s600 + $0x48] sm:$0xff]
      %v611 = vld [vmem:[%s600 + $0x50] sm:$0xff]
      %v612 = vld [vmem:[%s600 + $0x58] sm:$0xff]
      %v613 = vld [vmem:[%s600 + $0x60] sm:$0xff]
      %v614 = vld [vmem:[%s600 + $0x68] sm:$0xff]
      %v615 = vld [vmem:[%s600 + $0x70] sm:$0xff]
      %v616 = vld [vmem:[%s600 + $0x78] sm:$0xff]
      %617 = vmatprep.subr.mxu0 0.0
      %618 = vmatpush1.msra.mxu0 %v616
      %619 = vmatprep.subr.mxu0 0.0
      %620 = vmatpush1.msra.mxu0 %v615
      %621 = vmatprep.subr.mxu0 0.0
      %622 = vmatpush1.msra.mxu0 %v614
      %623 = vmatprep.subr.mxu0 0.0
      %624 = vmatpush1.msra.mxu0 %v613
      %625 = vmatprep.subr.mxu0 0.0
      %626 = vmatpush1.msra.mxu0 %v612
      %627 = vmatprep.subr.mxu0 0.0
      %628 = vmatpush1.msra.mxu0 %v611
      %629 = vmatprep.subr.mxu0 0.0
      %630 = vmatpush1.msra.mxu0 %v610
      %631 = vmatprep.subr.mxu0 0.0
      %632 = vmatpush1.msra.mxu0 %v609
      %633 = vmatprep.subr.mxu0 0.0
      %634 = vmatpush1.msra.mxu0 %v608
      %635 = vmatprep.subr.mxu0 0.0
      %636 = vmatpush1.msra.mxu0 %v607
      %637 = vmatprep.subr.mxu0 0.0
      %638 = vmatpush1.msra.mxu0 %v606
      %639 = vmatprep.subr.mxu0 0.0
      %640 = vmatpush1.msra.mxu0 %v605
      %641 = vmatprep.subr.mxu0 0.0
      %642 = vmatpush1.msra.mxu0 %v604
      %643 = vmatprep.subr.mxu0 0.0
      %644 = vmatpush1.msra.mxu0 %v603
      %645 = vmatprep.subr.mxu0 0.0
      %646 = vmatpush1.msra.mxu0 %v602
      %647 = vmatprep.subr.mxu0 0.0
      %648 = vmatpush1.msra.mxu0 %v601
      %649 = vmatprep.subr.mxu0 0.0
      %650 = vmatpush2.msra.mxu0 0.0
      %651 = vmatprep.subr.mxu0 0.0
      %652 = vmatpush2.msra.mxu0 0.0
      %653 = vmatprep.subr.mxu0 0.0
      %654 = vmatpush2.msra.mxu0 0.0
      %655 = vmatprep.subr.mxu0 0.0
      %656 = vmatpush2.msra.mxu0 0.0
      %657 = vmatprep.subr.mxu0 0.0
      %658 = vmatpush2.msra.mxu0 0.0
      %659 = vmatprep.subr.mxu0 0.0
      %660 = vmatpush2.msra.mxu0 0.0
      %661 = vmatprep.subr.mxu0 0.0
      %662 = vmatpush2.msra.mxu0 0.0
      %663 = vmatprep.subr.mxu0 0.0
      %664 = vmatpush2.msra.mxu0 0.0
      %665 = vmatprep.subr.mxu0 0.0
      %666 = vmatpush2.msra.mxu0 0.0
      %667 = vmatprep.subr.mxu0 0.0
      %668 = vmatpush2.msra.mxu0 0.0
      %669 = vmatprep.subr.mxu0 0.0
      %670 = vmatpush2.msra.mxu0 0.0
      %671 = vmatprep.subr.mxu0 0.0
      %672 = vmatpush2.msra.mxu0 0.0
      %673 = vmatprep.subr.mxu0 0.0
      %674 = vmatpush2.msra.mxu0 0.0
      %675 = vmatprep.subr.mxu0 0.0
      %676 = vmatpush2.msra.mxu0 0.0
      %677 = vmatprep.subr.mxu0 0.0
      %678 = vmatpush2.msra.mxu0 0.0
      %679 = vmatprep.subr.mxu0 0.0
      %680 = vmatpush2.msra.mxu0 0.0
      %681 = vmatprep.mubr.f32.mxu0 0.0
      %682 = vmatmul.mubr.f32.gmra.mxu0 %v349
      %v683 = vpop.f32.mrf.mxu0
      %v684 = vadd.f32 0.0, %v683
      %v685 = vpop.f32.mrf.mxu0
      %686 = vmatprep.mubr.f32.mxu0 0.0
      %687 = vmatmul.mubr.f32.gmra.mxu0 %v350
      %v688 = vpop.f32.mrf.mxu0
      %v689 = vadd.f32 0.0, %v688
      %v690 = vpop.f32.mrf.mxu0
      %691 = vmatprep.mubr.f32.mxu0 0.0
      %692 = vmatmul.mubr.f32.gmra.mxu0 %v351
      %v693 = vpop.f32.mrf.mxu0
      %v694 = vadd.f32 0.0, %v693
      %v695 = vpop.f32.mrf.mxu0
      %696 = vmatprep.mubr.f32.mxu0 0.0
      %697 = vmatmul.mubr.f32.gmra.mxu0 %v352
      %v698 = vpop.f32.mrf.mxu0
      %v699 = vadd.f32 0.0, %v698
      %v700 = vpop.f32.mrf.mxu0
      %701 = vmatprep.mubr.f32.mxu0 0.0
      %702 = vmatmul.mubr.f32.gmra.mxu0 %v353
      %v703 = vpop.f32.mrf.mxu0
      %v704 = vadd.f32 0.0, %v703
      %v705 = vpop.f32.mrf.mxu0
      %706 = vmatprep.mubr.f32.mxu0 0.0
      %707 = vmatmul.mubr.f32.gmra.mxu0 %v354
      %v708 = vpop.f32.mrf.mxu0
      %v709 = vadd.f32 0.0, %v708
      %v710 = vpop.f32.mrf.mxu0
      %711 = vmatprep.mubr.f32.mxu0 0.0
      %712 = vmatmul.mubr.f32.gmra.mxu0 %v355
      %v713 = vpop.f32.mrf.mxu0
      %v714 = vadd.f32 0.0, %v713
      %v715 = vpop.f32.mrf.mxu0
      %716 = vmatprep.mubr.f32.mxu0 0.0
      %717 = vmatmul.mubr.f32.gmra.mxu0 %v356
      %v718 = vpop.f32.mrf.mxu0
      %v719 = vadd.f32 0.0, %v718
      %v720 = vpop.f32.mrf.mxu0
      %721 = vdwg.mxu0
      %v722 = vadd.f32 %v562, %v684
      %v723 = vadd.f32 %v567, %v689
      %v724 = vadd.f32 %v572, %v694
      %v725 = vadd.f32 %v577, %v699
      %v726 = vadd.f32 %v582, %v704
      %v727 = vadd.f32 %v587, %v709
      %v728 = vadd.f32 %v592, %v714
      %v729 = vadd.f32 %v597, %v719
      %v730 = vld [vmem:[%s2] sm:$0x1]
      %v732 = vlaneseq
      %v733 = vshrl.u32 %v732, 7
      %v734 = vsub.s32 0, %v733
      %v735 = vrot.slane %v730, %v734
      %v737 = vadd.f32 %v722, %v735
      %v738 = vadd.f32 %v723, %v735
      %v739 = vadd.f32 %v724, %v735
      %v740 = vadd.f32 %v725, %v735
      %v741 = vadd.f32 %v726, %v735
      %v742 = vadd.f32 %v727, %v735
      %v743 = vadd.f32 %v728, %v735
      %v744 = vadd.f32 %v729, %v735
      %745 = vst [vmem:[%s260] sm:$0xff] %v737
      %746 = vst [vmem:[%s260 + $0x8] sm:$0xff] %v738
      %747 = vst [vmem:[%s260 + $0x10] sm:$0xff] %v739
      %748 = vst [vmem:[%s260 + $0x18] sm:$0xff] %v740
      %749 = vst [vmem:[%s260 + $0x20] sm:$0xff] %v741
      %750 = vst [vmem:[%s260 + $0x28] sm:$0xff] %v742
      %751 = vst [vmem:[%s260 + $0x30] sm:$0xff] %v743
      %752 = vst [vmem:[%s260 + $0x38] sm:$0xff] %v744
      %v753 = vadd.f32 %v737, %v738
      %v754 = vadd.f32 %v753, %v739
      %v755 = vadd.f32 %v754, %v740
      %v756 = vadd.f32 %v755, %v741
      %v757 = vadd.f32 %v756, %v742
      %v758 = vadd.f32 %v757, %v743
      %v759 = vadd.f32 %v758, %v744
      %v760 = vrot.slane %v759, 4
      %v761 = vadd.f32 %v759, %v760
      %v762 = vrot.slane %v761, 2
      %v763 = vadd.f32 %v761, %v762
      %v764 = vrot.slane %v763, 1
      %v765 = vadd.f32 %v763, %v764
      %v766 = vmul.f32 %v737, %v737
      %v767 = vmul.f32 %v738, %v738
      %v768 = vmul.f32 %v739, %v739
      %v769 = vmul.f32 %v740, %v740
      %v770 = vmul.f32 %v741, %v741
      %v771 = vmul.f32 %v742, %v742
      %v772 = vmul.f32 %v743, %v743
      %v773 = vmul.f32 %v744, %v744
      %v774 = vadd.f32 %v766, %v767
      %v775 = vadd.f32 %v774, %v768
      %v776 = vadd.f32 %v775, %v769
      %v777 = vadd.f32 %v776, %v770
      %v778 = vadd.f32 %v777, %v771
      %v779 = vadd.f32 %v778, %v772
      %v780 = vadd.f32 %v779, %v773
      %v781 = vrot.slane %v780, 4
      %v782 = vadd.f32 %v780, %v781
      %v783 = vrot.slane %v782, 2
      %v784 = vadd.f32 %v782, %v783
      %v785 = vrot.slane %v784, 1
      %v786 = vadd.f32 %v784, %v785
      %vm787 = vcmp.eq.s32.totalorder %v275, 0
      %v788 = vsel %vm787, %v765, %v786
      %789 = vst [vmem:[%s265] sm:$0x3] %v788
      %s790 = smul.u32 8, %s18
      %p791 = scmp.lt.s32.totalorder %s790, 15
      %s792 = scalar_select %p791, %s790, 15
      %s793 = smul.addr %s792, 8
      %s794 = scalar_lea.vmem %s5, %s793
      %p795 = scmp.lt.s32.totalorder %s18, 1
      %s796 = scalar_select %p795, %s18, 1
      %s797 = smul.addr %s796, 2
      %s798 = scalar_lea.vmem %s6, %s797
      // Predicated region
      $region41: #{basic_block_3d.3} parent=39 // pred_check
        %p799 = pneg %p146
      $region42: #{basic_block_3d.3} parent=39 // pred_check_branch
        %801 = sbr.rel (%p799) target = $region44
      $region43: #{basic_block_3d.3} parent=39 // pred_region
        %s802 = smul.u32 8, %s18
      $region44: #{basic_block_3d.3} parent=39 // pred_fallthru
        _
      // Predicated region
      $region45: #{basic_block_3d.3} parent=39 // pred_check
        %p803 = pneg %p172
      $region46: #{basic_block_3d.3} parent=39 // pred_check_branch
        %805 = sbr.rel (%p803) target = $region48
      $region47: #{basic_block_3d.3} parent=39 // pred_region
        _
      $region48: #{basic_block_3d.3} parent=39 // pred_fallthru
        _
    $region40: #{basic_block_3d.3} parent=5 // pred_fallthru
      _
    %p806 = scmp.le.s32.totalorder 2, %s13
    // Predicated region
    $region49: #{basic_block_3d.3} parent=5 // pred_check
      %p807 = pneg %p806
    $region50: #{basic_block_3d.3} parent=5 // pred_check_branch
      %809 = sbr.rel (%p807) target = $region52
    $region51: #{basic_block_3d.3} parent=5 // pred_region
      %s810 = ssub.s32 %s13, 2
      // Predicated region
      $region53: #{basic_block_3d.3} parent=51 // pred_check
        %p811 = pneg %p152
      $region54: #{basic_block_3d.3} parent=51 // pred_check_branch
        %813 = sbr.rel (%p811) target = $region56
      $region55: #{basic_block_3d.3} parent=51 // pred_region
        %s814 = smul.u32 8, %s19
        %p815 = scmp.lt.s32.totalorder %s814, 15
        %s816 = scalar_select %p815, %s814, 15
        %s817 = smul.addr %s816, 8
        %s818 = scalar_lea.vmem %s5, %s817
      $region56: #{basic_block_3d.3} parent=51 // pred_fallthru
        _
      // Predicated region
      $region57: #{basic_block_3d.3} parent=51 // pred_check
        %p819 = pneg %p178
      $region58: #{basic_block_3d.3} parent=51 // pred_check_branch
        %821 = sbr.rel (%p819) target = $region60
      $region59: #{basic_block_3d.3} parent=51 // pred_region
        %p822 = scmp.lt.s32.totalorder %s19, 1
        %s823 = scalar_select %p822, %s19, 1
        %s824 = smul.addr %s823, 2
        %s825 = scalar_lea.vmem %s6, %s824
      $region60: #{basic_block_3d.3} parent=51 // pred_fallthru
        _
    $region52: #{basic_block_3d.3} parent=5 // pred_fallthru
      _
  $region6: #{basic_block_3d.3} parent=0 // loop_footer
    %s17 = sadd.s32 1, %s13
  $region7: #{basic_block_3d.3} parent=0 // loop_footer_branch
    %12 = sbr.rel target = $region3
  $region8: #{basic_block_3d.3} parent=0 // loop_exit
    _

// kernel: basic_block_3d.4
$region0: #{basic_block_3d.4}
  #allocation0 [shape = 'u32[]', space=smem, size = 0x4, offset = 0x4, fixed_abs, tag = 'smem constant byte address 0x4 - core index']
  #allocation1 [shape = 'u32[144,128]{1,0:T(1,128)}', space=vmem, size = 0x12000, scoped, tag = 'internal scratch']
  %s0 = inlined_call_operand.vmem [shape: f32[128,128], index: 0, kind: input, shape index: {}]
  %s1 = inlined_call_operand.vmem [shape: f32[3,128,128], index: 1, kind: input, shape index: {}]
  %s2 = inlined_call_operand.vmem [shape: f32[1,128], index: 2, kind: input, shape index: {}]
  %s3 = inlined_call_operand.vmem [shape: f32[1,128], index: 3, kind: input, shape index: {}]
  %s4 = inlined_call_operand.vmem [shape: f32[1,128], index: 4, kind: input, shape index: {}]
  %s5 = inlined_call_operand.vmem [shape: f32[128,128], index: 5, kind: output, shape index: {0}]
  %s6 = inlined_call_operand.vmem [shape: f32[2,2,128], index: 6, kind: output, shape index: {1}]
  %7 = xla_tuple %s5, %s6
  %s8 = sld [smem:[#allocation0]]
  $region61: #{basic_block_3d.4} parent=0
    _
  %s10 = ssub.s32 1, %s8
  %s11 = scalar_select 0, %s10, %s8
  loop: start=0, step=1, limit=4
  $region2: #{basic_block_3d.4} parent=0 // loop_pre_header
    _
  $region3: #{basic_block_3d.4} parent=0 // loop_header
    %s13 = sphi 0, %s17
    %p14 = scmp.ge.s32.totalorder %s13, 4
    %s23 = sphi 0, %s25
    %s26 = sphi 0, %s23
    %s27 = sphi 0, %s26
    %s43 = sphi 0, %s27
    %s47 = sphi 0, %s47
    %s49 = sphi 0, %s47
    %s50 = sphi 0, %s49
    %s64 = sphi 0, %s50
    %s68 = sphi 0, %s68
    %s70 = sphi 0, %s68
    %s71 = sphi 0, %s70
    %s85 = sphi 0, %s71
    %s89 = sphi 0, %s89
    %s91 = sphi 0, %s89
    %s92 = sphi 0, %s91
    %s106 = sphi 0, %s92
    %s110 = sphi 0, %s110
    %s112 = sphi 0, %s110
    %s113 = sphi 0, %s112
    %s127 = sphi 0, %s113
    %s133 = sphi 0, %s135
    %s136 = sphi 0, %s133
    %s137 = sphi 0, %s136
    %s153 = sphi 0, %s137
    %s159 = sphi 0, %s161
    %s162 = sphi 0, %s159
    %s163 = sphi 0, %s162
    %s179 = sphi 0, %s163
  $region4: #{basic_block_3d.4} parent=0 // loop_header_branch
    %16 = sbr.rel (%p14) target = $region8
  $region5: #{basic_block_3d.4} parent=0 // loop_body
    %s18 = ssub.s32 %s13, 1
    %s19 = ssub.s32 %s13, 2
    %s20 = sadd.s32 %s13, 1
    %s21 = ssub.s32 %s13, %s20
    %p22 = scmp.eq.s32.totalorder %s21, 0
    %s24 = sadd.s32 %s23, 1
    %s25 = scalar_select %p22, %s23, %s24
    %p28 = pneg %p22
    %p29 = scmp.eq.s32.totalorder %s13, 1
    %p30 = por %p28, %p29
    %p31 = scmp.ne.s32.totalorder %s23, %s26
    %p32 = scmp.eq.s32.totalorder %s13, 0
    %p33 = por %p31, %p32
    %p34 = scmp.ne.s32.totalorder %s23, %s26
    %p35 = scmp.eq.s32.totalorder %s18, 1
    %p36 = por %p34, %p35
    %p37 = scmp.ne.s32.totalorder %s26, %s27
    %p38 = scmp.eq.s32.totalorder %s18, 0
    %p39 = por %p37, %p38
    %p40 = scmp.ne.s32.totalorder %s26, %s27
    %p41 = scmp.eq.s32.totalorder %s19, 1
    %p42 = por %p40, %p41
    %p44 = scmp.ne.s32.totalorder %s27, %s43
    %p45 = scmp.eq.s32.totalorder %s19, 0
    %p46 = por %p44, %p45
    %s48 = sadd.s32 %s47, 1
    %p51 = scmp.eq.s32.totalorder %s13, 1
    %p52 = scmp.ne.s32.totalorder %s47, %s49
    %p53 = scmp.eq.s32.totalorder %s13, 0
    %p54 = por %p52, %p53
    %p55 = scmp.ne.s32.totalorder %s47, %s49
    %p56 = scmp.eq.s32.totalorder %s18, 1
    %p57 = por %p55, %p56
    %p58 = scmp.ne.s32.totalorder %s49, %s50
    %p59 = scmp.eq.s32.totalorder %s18, 0
    %p60 = por %p58, %p59
    %p61 = scmp.ne.s32.totalorder %s49, %s50
    %p62 = scmp.eq.s32.totalorder %s19, 1
    %p63 = por %p61, %p62
    %p65 = scmp.ne.s32.totalorder %s50, %s64
    %p66 = scmp.eq.s32.totalorder %s19, 0
    %p67 = por %p65, %p66
    %s69 = sadd.s32 %s68, 1
    %p72 = scmp.eq.s32.totalorder %s13, 1
    %p73 = scmp.ne.s32.totalorder %s68, %s70
    %p74 = scmp.eq.s32.totalorder %s13, 0
    %p75 = por %p73, %p74
    %p76 = scmp.ne.s32.totalorder %s68, %s70
    %p77 = scmp.eq.s32.totalorder %s18, 1
    %p78 = por %p76, %p77
    %p79 = scmp.ne.s32.totalorder %s70, %s71
    %p80 = scmp.eq.s32.totalorder %s18, 0
    %p81 = por %p79, %p80
    %p82 = scmp.ne.s32.totalorder %s70, %s71
    %p83 = scmp.eq.s32.totalorder %s19, 1
    %p84 = por %p82, %p83
    %p86 = scmp.ne.s32.totalorder %s71, %s85
    %p87 = scmp.eq.s32.totalorder %s19, 0
    %p88 = por %p86, %p87
    %s90 = sadd.s32 %s89, 1
    %p93 = scmp.eq.s32.totalorder %s13, 1
    %p94 = scmp.ne.s32.totalorder %s89, %s91
    %p95 = scmp.eq.s32.totalorder %s13, 0
    %p96 = por %p94, %p95
    %p97 = scmp.ne.s32.totalorder %s89, %s91
    %p98 = scmp.eq.s32.totalorder %s18, 1
    %p99 = por %p97, %p98
    %p100 = scmp.ne.s32.totalorder %s91, %s92
    %p101 = scmp.eq.s32.totalorder %s18, 0
    %p102 = por %p100, %p101
    %p103 = scmp.ne.s32.totalorder %s91, %s92
    %p104 = scmp.eq.s32.totalorder %s19, 1
    %p105 = por %p103, %p104
    %p107 = scmp.ne.s32.totalorder %s92, %s106
    %p108 = scmp.eq.s32.totalorder %s19, 0
    %p109 = por %p107, %p108
    %s111 = sadd.s32 %s110, 1
    %p114 = scmp.eq.s32.totalorder %s13, 1
    %p115 = scmp.ne.s32.totalorder %s110, %s112
    %p116 = scmp.eq.s32.totalorder %s13, 0
    %p117 = por %p115, %p116
    %p118 = scmp.ne.s32.totalorder %s110, %s112
    %p119 = scmp.eq.s32.totalorder %s18, 1
    %p120 = por %p118, %p119
    %p121 = scmp.ne.s32.totalorder %s112, %s113
    %p122 = scmp.eq.s32.totalorder %s18, 0
    %p123 = por %p121, %p122
    %p124 = scmp.ne.s32.totalorder %s112, %s113
    %p125 = scmp.eq.s32.totalorder %s19, 1
    %p126 = por %p124, %p125
    %p128 = scmp.ne.s32.totalorder %s113, %s127
    %p129 = scmp.eq.s32.totalorder %s19, 0
    %p130 = por %p128, %p129
    %s131 = ssub.s32 %s13, %s20
    %p132 = scmp.eq.s32.totalorder %s131, 0
    %s134 = sadd.s32 %s133, 1
    %s135 = scalar_select %p132, %s133, %s134
    %p138 = pneg %p132
    %p139 = scmp.eq.s32.totalorder %s13, 1
    %p140 = por %p138, %p139
    %p141 = scmp.ne.s32.totalorder %s133, %s136
    %p142 = scmp.eq.s32.totalorder %s13, 0
    %p143 = por %p141, %p142
    %p144 = scmp.ne.s32.totalorder %s133, %s136
    %p145 = scmp.eq.s32.totalorder %s18, 1
    %p146 = por %p144, %p145
    %p147 = scmp.ne.s32.totalorder %s136, %s137
    %p148 = scmp.eq.s32.totalorder %s18, 0
    %p149 = por %p147, %p148
    %p150 = scmp.ne.s32.totalorder %s136, %s137
    %p151 = scmp.eq.s32.totalorder %s19, 1
    %p152 = por %p150, %p151
    %p154 = scmp.ne.s32.totalorder %s137, %s153
    %p155 = scmp.eq.s32.totalorder %s19, 0
    %p156 = por %p154, %p155
    %s157 = ssub.s32 %s13, %s20
    %p158 = scmp.eq.s32.totalorder %s157, 0
    %s160 = sadd.s32 %s159, 1
    %s161 = scalar_select %p158, %s159, %s160
    %p164 = pneg %p158
    %p165 = scmp.eq.s32.totalorder %s13, 1
    %p166 = por %p164, %p165
    %p167 = scmp.ne.s32.totalorder %s159, %s162
    %p168 = scmp.eq.s32.totalorder %s13, 0
    %p169 = por %p167, %p168
    %p170 = scmp.ne.s32.totalorder %s159, %s162
    %p171 = scmp.eq.s32.totalorder %s18, 1
    %p172 = por %p170, %p171
    %p173 = scmp.ne.s32.totalorder %s162, %s163
    %p174 = scmp.eq.s32.totalorder %s18, 0
    %p175 = por %p173, %p174
    %p176 = scmp.ne.s32.totalorder %s162, %s163
    %p177 = scmp.eq.s32.totalorder %s19, 1
    %p178 = por %p176, %p177
    %p180 = scmp.ne.s32.totalorder %s163, %s179
    %p181 = scmp.eq.s32.totalorder %s19, 0
    %p182 = por %p180, %p181
    %p183 = scmp.le.s32.totalorder 1, %s13
    %p184 = scmp.lt.s32.totalorder %s13, 3
    %p185 = pnand %p183, %p184
    %p186 = pneg %p185
    // Predicated region
    $region9: #{basic_block_3d.4} parent=5 // pred_check
      _
    $region10: #{basic_block_3d.4} parent=5 // pred_check_branch
      %188 = sbr.rel (%p185) target = $region12
    $region11: #{basic_block_3d.4} parent=5 // pred_region
      %s189 = ssub.s32 %s13, 1
      // Predicated region
      $region13: #{basic_block_3d.4} parent=11 // pred_check
        %p190 = pneg %p60
      $region14: #{basic_block_3d.4} parent=11 // pred_check_branch
        %192 = sbr.rel (%p190) target = $region16
      $region15: #{basic_block_3d.4} parent=11 // pred_region
        _
      $region16: #{basic_block_3d.4} parent=11 // pred_fallthru
        _
      // Predicated region
      $region17: #{basic_block_3d.4} parent=11 // pred_check
        %p193 = pneg %p81
      $region18: #{basic_block_3d.4} parent=11 // pred_check_branch
        %195 = sbr.rel (%p193) target = $region20
      $region19: #{basic_block_3d.4} parent=11 // pred_region
        _
      $region20: #{basic_block_3d.4} parent=11 // pred_fallthru
        _
      // Predicated region
      $region21: #{basic_block_3d.4} parent=11 // pred_check
        %p196 = pneg %p102
      $region22: #{basic_block_3d.4} parent=11 // pred_check_branch
        %198 = sbr.rel (%p196) target = $region24
      $region23: #{basic_block_3d.4} parent=11 // pred_region
        _
      $region24: #{basic_block_3d.4} parent=11 // pred_fallthru
        _
      // Predicated region
      $region25: #{basic_block_3d.4} parent=11 // pred_check
        %p199 = pneg %p123
      $region26: #{basic_block_3d.4} parent=11 // pred_check_branch
        %201 = sbr.rel (%p199) target = $region28
      $region27: #{basic_block_3d.4} parent=11 // pred_region
        _
      $region28: #{basic_block_3d.4} parent=11 // pred_fallthru
        _
    $region12: #{basic_block_3d.4} parent=5 // pred_fallthru
      _
    %p202 = scmp.lt.s32.totalorder %s13, 2
    // Predicated region
    $region29: #{basic_block_3d.4} parent=5 // pred_check
      %p203 = pneg %p202
    $region30: #{basic_block_3d.4} parent=5 // pred_check_branch
      %205 = sbr.rel (%p203) target = $region32
    $region31: #{basic_block_3d.4} parent=5 // pred_region
      // Predicated region
      $region33: #{basic_block_3d.4} parent=31 // pred_check
        %p206 = pneg %p33
      $region34: #{basic_block_3d.4} parent=31 // pred_check_branch
        %208 = sbr.rel (%p206) target = $region36
      $region35: #{basic_block_3d.4} parent=31 // pred_region
        %s209 = smul.u32 8, %s13
        %p210 = scmp.lt.s32.totalorder %s209, 15
        %s211 = scalar_select %p210, %s209, 15
        %s212 = smul.addr %s211, 8
        %s213 = scalar_lea.vmem %s0, %s212
        %s214 = smul.u32 8, %s13
      $region36: #{basic_block_3d.4} parent=31 // pred_fallthru
        _
    $region32: #{basic_block_3d.4} parent=5 // pred_fallthru
      _
    %p215 = scmp.le.s32.totalorder 1, %s13
    %p216 = scmp.lt.s32.totalorder %s13, 3
    %p217 = pnand %p215, %p216
    %p218 = pneg %p217
    // Predicated region
    $region37: #{basic_block_3d.4} parent=5 // pred_check
      _
    $region38: #{basic_block_3d.4} parent=5 // pred_check_branch
      %220 = sbr.rel (%p217) target = $region40
    $region39: #{basic_block_3d.4} parent=5 // pred_region
      %s221 = ssub.s32 %s13, 1
      %s222 = smul.u32 8, %s18
      %p223 = scmp.lt.s32.totalorder %s222, 15
      %s224 = scalar_select %p223, %s222, 15
      %s225 = smul.addr %s224, 8
      %s226 = scalar_lea.vmem %s0, %s225
      %p227 = pneg %p39
      %p228 = pneg %p36
      %p229 = pneg %p60
      %p230 = pneg %p57
      %p231 = pneg %p81
      %p232 = pneg %p78
      %p233 = pneg %p102
      %p234 = pneg %p99
      %p235 = pneg %p123
      %p236 = pneg %p120
      %p237 = pneg %p149
      %p238 = pneg %p146
      %s239 = smul.u32 8, %s18
      %p240 = scmp.lt.s32.totalorder %s239, 15
      %s241 = scalar_select %p240, %s239, 15
      %s242 = smul.addr %s241, 8
      %s243 = scalar_lea.vmem %s5, %s242
      %p244 = pneg %p175
      %p245 = pneg %p172
      %p246 = scmp.lt.s32.totalorder %s18, 1
      %s247 = scalar_select %p246, %s18, 1
      %s248 = smul.addr %s247, 2
      %s249 = scalar_lea.vmem %s6, %s248
      %s250 = smul.u32 8, %s18
      %p251 = scmp.lt.s32.totalorder %s250, 15
      %s252 = scalar_select %p251, %s250, 15
      %s253 = smul.addr %s252, 8
      %s254 = scalar_lea.vmem %s0, %s253
      %s255 = smul.u32 8, %s18
      %s256 = smul.u32 8, %s18
      %p257 = scmp.lt.s32.totalorder %s256, 15
      %s258 = scalar_select %p257, %s256, 15
      %s259 = smul.addr %s258, 8
      %s260 = scalar_lea.vmem %s5, %s259
      %s261 = smul.u32 8, %s18
      %p262 = scmp.lt.s32.totalorder %s18, 1
      %s263 = scalar_select %p262, %s18, 1
      %s264 = smul.addr %s263, 2
      %s265 = scalar_lea.vmem %s6, %s264
      %v266 = vld [vmem:[%s254] sm:$0xff]
      %v267 = vld [vmem:[%s254 + $0x8] sm:$0xff]
      %v268 = vld [vmem:[%s254 + $0x10] sm:$0xff]
      %v269 = vld [vmem:[%s254 + $0x18] sm:$0xff]
      %v270 = vld [vmem:[%s254 + $0x20] sm:$0xff]
      %v271 = vld [vmem:[%s254 + $0x28] sm:$0xff]
      %v272 = vld [vmem:[%s254 + $0x30] sm:$0xff]
      %v273 = vld [vmem:[%s254 + $0x38] sm:$0xff]
      %v274 = vld [vmem:[%s3] sm:$0x1]
      %v276 = vlaneseq
      %v277 = vshrl.u32 %v276, 7
      %v278 = vsub.s32 0, %v277
      %v279 = vrot.slane %v274, %v278
      %v281 = vmul.f32 %v266, %v279
      %v282 = vmul.f32 %v267, %v279
      %v283 = vmul.f32 %v268, %v279
      %v284 = vmul.f32 %v269, %v279
      %v285 = vmul.f32 %v270, %v279
      %v286 = vmul.f32 %v271, %v279
      %v287 = vmul.f32 %v272, %v279
      %v288 = vmul.f32 %v273, %v279
      %v289 = vld [vmem:[%s4] sm:$0x1]
      %v291 = vlaneseq
      %v292 = vshrl.u32 %v291, 7
      %v293 = vsub.s32 0, %v292
      %v294 = vrot.slane %v289, %v293
      %v296 = vadd.f32 %v281, %v294
      %v297 = vadd.f32 %v282, %v294
      %v298 = vadd.f32 %v283, %v294
      %v299 = vadd.f32 %v284, %v294
      %v300 = vadd.f32 %v285, %v294
      %v301 = vadd.f32 %v286, %v294
      %v302 = vadd.f32 %v287, %v294
      %v303 = vadd.f32 %v288, %v294
      %v304 = vmax.f32 %v296, 0.0
      %v305 = vmax.f32 %v297, 0.0
      %v306 = vmax.f32 %v298, 0.0
      %v307 = vmax.f32 %v299, 0.0
      %v308 = vmax.f32 %v300, 0.0
      %v309 = vmax.f32 %v301, 0.0
      %v310 = vmax.f32 %v302, 0.0
      %v311 = vmax.f32 %v303, 0.0
      %v312 = vlaneseq
      %v313 = vshrl.u32 %v312, 7
      %v314 = vadd.s32 %v313, 8
      %v315 = vadd.s32 %v313, 16
      %v316 = vadd.s32 %v313, 24
      %v317 = vadd.s32 %v313, 32
      %v318 = vadd.s32 %v313, 40
      %v319 = vadd.s32 %v313, 48
      %v320 = vadd.s32 %v313, 56
      %v321 = vand.u32 %v313, 15
      %v322 = vand.u32 %v314, 15
      %v323 = vand.u32 %v315, 15
      %v324 = vand.u32 %v316, 15
      %v325 = vand.u32 %v317, 15
      %v326 = vand.u32 %v318, 15
      %v327 = vand.u32 %v319, 15
      %v328 = vand.u32 %v320, 15
      %vm329 = vcmp.eq.s32.totalorder %v321, 0
      %vm330 = vcmp.eq.s32.totalorder %v322, 0
      %vm331 = vcmp.eq.s32.totalorder %v323, 0
      %vm332 = vcmp.eq.s32.totalorder %v324, 0
      %vm333 = vcmp.eq.s32.totalorder %v325, 0
      %vm334 = vcmp.eq.s32.totalorder %v326, 0
      %vm335 = vcmp.eq.s32.totalorder %v327, 0
      %vm336 = vcmp.eq.s32.totalorder %v328, 0
      %v337 = vrot.slane %v304, 7
      %v338 = vrot.slane %v305, 7
      %v339 = vrot.slane %v306, 7
      %v340 = vrot.slane %v307, 7
      %v341 = vrot.slane %v308, 7
      %v342 = vrot.slane %v309, 7
      %v343 = vrot.slane %v310, 7
      %v344 = vrot.slane %v311, 7
      %vm345 = vcmp.lt.s32.totalorder %v313, 1
      %v346 = vsel %vm345, %v343, %v344
      %v347 = vsel %vm345, %v342, %v343
      %v348 = vsel %vm345, %v341, %v342
      %v349 = vsel %vm345, %v340, %v341
      %v350 = vsel %vm345, %v339, %v340
      %v351 = vsel %vm345, %v338, %v339
      %v352 = vsel %vm345, %v337, %v338
      %v353 = vsel %vm345, %v344, %v337
      %v354 = vsel %vm329, 0.0, %v353
      %v355 = vsel %vm330, 0.0, %v352
      %v356 = vsel %vm331, 0.0, %v351
      %v357 = vsel %vm332, 0.0, %v350
      %v358 = vsel %vm333, 0.0, %v349
      %v359 = vsel %vm334, 0.0, %v348
      %v360 = vsel %vm335, 0.0, %v347
      %v361 = vsel %vm336, 0.0, %v346
      %vm362 = vcmp.eq.s32.totalorder %v321, 15
      %vm363 = vcmp.eq.s32.totalorder %v322, 15
      %vm364 = vcmp.eq.s32.totalorder %v323, 15
      %vm365 = vcmp.eq.s32.totalorder %v324, 15
      %vm366 = vcmp.eq.s32.totalorder %v325, 15
      %vm367 = vcmp.eq.s32.totalorder %v326, 15
      %vm368 = vcmp.eq.s32.totalorder %v327, 15
      %vm369 = vcmp.eq.s32.totalorder %v328, 15
      %v370 = vrot.slane %v304, 1
      %v371 = vrot.slane %v305, 1
      %v372 = vrot.slane %v306, 1
      %v373 = vrot.slane %v307, 1
      %v374 = vrot.slane %v308, 1
      %v375 = vrot.slane %v309, 1
      %v376 = vrot.slane %v310, 1
      %v377 = vrot.slane %v311, 1
      %vm378 = vcmp.lt.s32.totalorder %v313, 7
      %v379 = vsel %vm378, %v376, %v377
      %v380 = vsel %vm378, %v375, %v376
      %v381 = vsel %vm378, %v374, %v375
      %v382 = vsel %vm378, %v373, %v374
      %v383 = vsel %vm378, %v372, %v373
      %v384 = vsel %vm378, %v371, %v372
      %v385 = vsel %vm378, %v370, %v371
      %v386 = vsel %vm378, %v377, %v370
      %v387 = vsel %vm362, 0.0, %v385
      %v388 = vsel %vm363, 0.0, %v384
      %v389 = vsel %vm364, 0.0, %v383
      %v390 = vsel %vm365, 0.0, %v382
      %v391 = vsel %vm366, 0.0, %v381
      %v392 = vsel %vm367, 0.0, %v380
      %v393 = vsel %vm368, 0.0, %v379
      %v394 = vsel %vm369, 0.0, %v386
      %v395 = vld [vmem:[%s1] sm:$0xff]
      %v396 = vld [vmem:[%s1 + $0x8] sm:$0xff]
      %v397 = vld [vmem:[%s1 + $0x10] sm:$0xff]
      %v398 = vld [vmem:[%s1 + $0x18] sm:$0xff]
      %v399 = vld [vmem:[%s1 + $0x20] sm:$0xff]
      %v400 = vld [vmem:[%s1 + $0x28] sm:$0xff]
      %v401 = vld [vmem:[%s1 + $0x30] sm:$0xff]
      %v402 = vld [vmem:[%s1 + $0x38] sm:$0xff]
      %v403 = vld [vmem:[%s1 + $0x40] sm:$0xff]
      %v404 = vld [vmem:[%s1 + $0x48] sm:$0xff]
      %v405 = vld [vmem:[%s1 + $0x50] sm:$0xff]
      %v406 = vld [vmem:[%s1 + $0x58] sm:$0xff]
      %v407 = vld [vmem:[%s1 + $0x60] sm:$0xff]
      %v408 = vld [vmem:[%s1 + $0x68] sm:$0xff]
      %v409 = vld [vmem:[%s1 + $0x70] sm:$0xff]
      %v410 = vld [vmem:[%s1 + $0x78] sm:$0xff]
      %s411 = scalar_lea.vmem %s1, 128
      %v412 = vld [vmem:[%s411] sm:$0xff]
      %v413 = vld [vmem:[%s411 + $0x8] sm:$0xff]
      %v414 = vld [vmem:[%s411 + $0x10] sm:$0xff]
      %v415 = vld [vmem:[%s411 + $0x18] sm:$0xff]
      %v416 = vld [vmem:[%s411 + $0x20] sm:$0xff]
      %v417 = vld [vmem:[%s411 + $0x28] sm:$0xff]
      %v418 = vld [vmem:[%s411 + $0x30] sm:$0xff]
      %v419 = vld [vmem:[%s411 + $0x38] sm:$0xff]
      %v420 = vld [vmem:[%s411 + $0x40] sm:$0xff]
      %v421 = vld [vmem:[%s411 + $0x48] sm:$0xff]
      %v422 = vld [vmem:[%s411 + $0x50] sm:$0xff]
      %v423 = vld [vmem:[%s411 + $0x58] sm:$0xff]
      %v424 = vld [vmem:[%s411 + $0x60] sm:$0xff]
      %v425 = vld [vmem:[%s411 + $0x68] sm:$0xff]
      %v426 = vld [vmem:[%s411 + $0x70] sm:$0xff]
      %v427 = vld [vmem:[%s411 + $0x78] sm:$0xff]
      %428 = vmatprep.subr.mxu0 0.0
      %429 = vmatpush1.msra.mxu0 %v427
      %430 = vmatprep.subr.mxu0 0.0
      %431 = vmatpush1.msra.mxu0 %v426
      %432 = vmatprep.subr.mxu0 0.0
      %433 = vmatpush1.msra.mxu0 %v425
      %434 = vmatprep.subr.mxu0 0.0
      %435 = vmatpush1.msra.mxu0 %v424
      %436 = vmatprep.subr.mxu0 0.0
      %437 = vmatpush1.msra.mxu0 %v423
      %438 = vmatprep.subr.mxu0 0.0
      %439 = vmatpush1.msra.mxu0 %v422
      %440 = vmatprep.subr.mxu0 0.0
      %441 = vmatpush1.msra.mxu0 %v421
      %442 = vmatprep.subr.mxu0 0.0
      %443 = vmatpush1.msra.mxu0 %v420
      %444 = vmatprep.subr.mxu0 0.0
      %445 = vmatpush1.msra.mxu0 %v419
      %446 = vmatprep.subr.mxu0 0.0
      %447 = vmatpush1.msra.mxu0 %v418
      %448 = vmatprep.subr.mxu0 0.0
      %449 = vmatpush1.msra.mxu0 %v417
      %450 = vmatprep.subr.mxu0 0.0
      %451 = vmatpush1.msra.mxu0 %v416
      %452 = vmatprep.subr.mxu0 0.0
      %453 = vmatpush1.msra.mxu0 %v415
      %454 = vmatprep.subr.mxu0 0.0
      %455 = vmatpush1.msra.mxu0 %v414
      %456 = vmatprep.subr.mxu0 0.0
      %457 = vmatpush1.msra.mxu0 %v413
      %458 = vmatprep.subr.mxu0 0.0
      %459 = vmatpush1.msra.mxu0 %v412
      %460 = vmatprep.subr.mxu0 0.0
      %461 = vmatpush2.msra.mxu0 0.0
      %462 = vmatprep.subr.mxu0 0.0
      %463 = vmatpush2.msra.mxu0 0.0
      %464 = vmatprep.subr.mxu0 0.0
      %465 = vmatpush2.msra.mxu0 0.0
      %466 = vmatprep.subr.mxu0 0.0
      %467 = vmatpush2.msra.mxu0 0.0
      %468 = vmatprep.subr.mxu0 0.0
      %469 = vmatpush2.msra.mxu0 0.0
      %470 = vmatprep.subr.mxu0 0.0
      %471 = vmatpush2.msra.mxu0 0.0
      %472 = vmatprep.subr.mxu0 0.0
      %473 = vmatpush2.msra.mxu0 0.0
      %474 = vmatprep.subr.mxu0 0.0
      %475 = vmatpush2.msra.mxu0 0.0
      %476 = vmatprep.subr.mxu0 0.0
      %477 = vmatpush2.msra.mxu0 0.0
      %478 = vmatprep.subr.mxu0 0.0
      %479 = vmatpush2.msra.mxu0 0.0
      %480 = vmatprep.subr.mxu0 0.0
      %481 = vmatpush2.msra.mxu0 0.0
      %482 = vmatprep.subr.mxu0 0.0
      %483 = vmatpush2.msra.mxu0 0.0
      %484 = vmatprep.subr.mxu0 0.0
      %485 = vmatpush2.msra.mxu0 0.0
      %486 = vmatprep.subr.mxu0 0.0
      %487 = vmatpush2.msra.mxu0 0.0
      %488 = vmatprep.subr.mxu0 0.0
      %489 = vmatpush2.msra.mxu0 0.0
      %490 = vmatprep.subr.mxu0 0.0
      %491 = vmatpush2.msra.mxu0 0.0
      %492 = vmatprep.mubr.f32.mxu0 0.0
      %493 = vmatmul.mubr.f32.gmra.mxu0 %v304
      %v494 = vpop.f32.mrf.mxu0
      %v495 = vadd.f32 0.0, %v494
      %v496 = vpop.f32.mrf.mxu0
      %497 = vmatprep.mubr.f32.mxu0 0.0
      %498 = vmatmul.mubr.f32.gmra.mxu0 %v305
      %v499 = vpop.f32.mrf.mxu0
      %v500 = vadd.f32 0.0, %v499
      %v501 = vpop.f32.mrf.mxu0
      %502 = vmatprep.mubr.f32.mxu0 0.0
      %503 = vmatmul.mubr.f32.gmra.mxu0 %v306
      %v504 = vpop.f32.mrf.mxu0
      %v505 = vadd.f32 0.0, %v504
      %v506 = vpop.f32.mrf.mxu0
      %507 = vmatprep.mubr.f32.mxu0 0.0
      %508 = vmatmul.mubr.f32.gmra.mxu0 %v307
      %v509 = vpop.f32.mrf.mxu0
      %v510 = vadd.f32 0.0, %v509
      %v511 = vpop.f32.mrf.mxu0
      %512 = vmatprep.mubr.f32.mxu0 0.0
      %513 = vmatmul.mubr.f32.gmra.mxu0 %v308
      %v514 = vpop.f32.mrf.mxu0
      %v515 = vadd.f32 0.0, %v514
      %v516 = vpop.f32.mrf.mxu0
      %517 = vmatprep.mubr.f32.mxu0 0.0
      %518 = vmatmul.mubr.f32.gmra.mxu0 %v309
      %v519 = vpop.f32.mrf.mxu0
      %v520 = vadd.f32 0.0, %v519
      %v521 = vpop.f32.mrf.mxu0
      %522 = vmatprep.mubr.f32.mxu0 0.0
      %523 = vmatmul.mubr.f32.gmra.mxu0 %v310
      %v524 = vpop.f32.mrf.mxu0
      %v525 = vadd.f32 0.0, %v524
      %v526 = vpop.f32.mrf.mxu0
      %527 = vmatprep.mubr.f32.mxu0 0.0
      %528 = vmatmul.mubr.f32.gmra.mxu0 %v311
      %v529 = vpop.f32.mrf.mxu0
      %v530 = vadd.f32 0.0, %v529
      %v531 = vpop.f32.mrf.mxu0
      %532 = vdwg.mxu0
      %533 = vmatprep.subr.mxu0 0.0
      %534 = vmatpush1.msra.mxu0 %v410
      %535 = vmatprep.subr.mxu0 0.0
      %536 = vmatpush1.msra.mxu0 %v409
      %537 = vmatprep.subr.mxu0 0.0
      %538 = vmatpush1.msra.mxu0 %v408
      %539 = vmatprep.subr.mxu0 0.0
      %540 = vmatpush1.msra.mxu0 %v407
      %541 = vmatprep.subr.mxu0 0.0
      %542 = vmatpush1.msra.mxu0 %v406
      %543 = vmatprep.subr.mxu0 0.0
      %544 = vmatpush1.msra.mxu0 %v405
      %545 = vmatprep.subr.mxu0 0.0
      %546 = vmatpush1.msra.mxu0 %v404
      %547 = vmatprep.subr.mxu0 0.0
      %548 = vmatpush1.msra.mxu0 %v403
      %549 = vmatprep.subr.mxu0 0.0
      %550 = vmatpush1.msra.mxu0 %v402
      %551 = vmatprep.subr.mxu0 0.0
      %552 = vmatpush1.msra.mxu0 %v401
      %553 = vmatprep.subr.mxu0 0.0
      %554 = vmatpush1.msra.mxu0 %v400
      %555 = vmatprep.subr.mxu0 0.0
      %556 = vmatpush1.msra.mxu0 %v399
      %557 = vmatprep.subr.mxu0 0.0
      %558 = vmatpush1.msra.mxu0 %v398
      %559 = vmatprep.subr.mxu0 0.0
      %560 = vmatpush1.msra.mxu0 %v397
      %561 = vmatprep.subr.mxu0 0.0
      %562 = vmatpush1.msra.mxu0 %v396
      %563 = vmatprep.subr.mxu0 0.0
      %564 = vmatpush1.msra.mxu0 %v395
      %565 = vmatprep.subr.mxu0 0.0
      %566 = vmatpush2.msra.mxu0 0.0
      %567 = vmatprep.subr.mxu0 0.0
      %568 = vmatpush2.msra.mxu0 0.0
      %569 = vmatprep.subr.mxu0 0.0
      %570 = vmatpush2.msra.mxu0 0.0
      %571 = vmatprep.subr.mxu0 0.0
      %572 = vmatpush2.msra.mxu0 0.0
      %573 = vmatprep.subr.mxu0 0.0
      %574 = vmatpush2.msra.mxu0 0.0
      %575 = vmatprep.subr.mxu0 0.0
      %576 = vmatpush2.msra.mxu0 0.0
      %577 = vmatprep.subr.mxu0 0.0
      %578 = vmatpush2.msra.mxu0 0.0
      %579 = vmatprep.subr.mxu0 0.0
      %580 = vmatpush2.msra.mxu0 0.0
      %581 = vmatprep.subr.mxu0 0.0
      %582 = vmatpush2.msra.mxu0 0.0
      %583 = vmatprep.subr.mxu0 0.0
      %584 = vmatpush2.msra.mxu0 0.0
      %585 = vmatprep.subr.mxu0 0.0
      %586 = vmatpush2.msra.mxu0 0.0
      %587 = vmatprep.subr.mxu0 0.0
      %588 = vmatpush2.msra.mxu0 0.0
      %589 = vmatprep.subr.mxu0 0.0
      %590 = vmatpush2.msra.mxu0 0.0
      %591 = vmatprep.subr.mxu0 0.0
      %592 = vmatpush2.msra.mxu0 0.0
      %593 = vmatprep.subr.mxu0 0.0
      %594 = vmatpush2.msra.mxu0 0.0
      %595 = vmatprep.subr.mxu0 0.0
      %596 = vmatpush2.msra.mxu0 0.0
      %597 = vmatprep.mubr.f32.mxu0 0.0
      %598 = vmatmul.mubr.f32.gmra.mxu0 %v354
      %v599 = vpop.f32.mrf.mxu0
      %v600 = vadd.f32 %v495, %v599
      %v601 = vpop.f32.mrf.mxu0
      %602 = vmatprep.mubr.f32.mxu0 0.0
      %603 = vmatmul.mubr.f32.gmra.mxu0 %v355
      %v604 = vpop.f32.mrf.mxu0
      %v605 = vadd.f32 %v500, %v604
      %v606 = vpop.f32.mrf.mxu0
      %607 = vmatprep.mubr.f32.mxu0 0.0
      %608 = vmatmul.mubr.f32.gmra.mxu0 %v356
      %v609 = vpop.f32.mrf.mxu0
      %v610 = vadd.f32 %v505, %v609
      %v611 = vpop.f32.mrf.mxu0
      %612 = vmatprep.mubr.f32.mxu0 0.0
      %613 = vmatmul.mubr.f32.gmra.mxu0 %v357
      %v614 = vpop.f32.mrf.mxu0
      %v615 = vadd.f32 %v510, %v614
      %v616 = vpop.f32.mrf.mxu0
      %617 = vmatprep.mubr.f32.mxu0 0.0
      %618 = vmatmul.mubr.f32.gmra.mxu0 %v358
      %v619 = vpop.f32.mrf.mxu0
      %v620 = vadd.f32 %v515, %v619
      %v621 = vpop.f32.mrf.mxu0
      %622 = vmatprep.mubr.f32.mxu0 0.0
      %623 = vmatmul.mubr.f32.gmra.mxu0 %v359
      %v624 = vpop.f32.mrf.mxu0
      %v625 = vadd.f32 %v520, %v624
      %v626 = vpop.f32.mrf.mxu0
      %627 = vmatprep.mubr.f32.mxu0 0.0
      %628 = vmatmul.mubr.f32.gmra.mxu0 %v360
      %v629 = vpop.f32.mrf.mxu0
      %v630 = vadd.f32 %v525, %v629
      %v631 = vpop.f32.mrf.mxu0
      %632 = vmatprep.mubr.f32.mxu0 0.0
      %633 = vmatmul.mubr.f32.gmra.mxu0 %v361
      %v634 = vpop.f32.mrf.mxu0
      %v635 = vadd.f32 %v530, %v634
      %v636 = vpop.f32.mrf.mxu0
      %637 = vdwg.mxu0
      %s638 = scalar_lea.vmem %s1, 256
      %v639 = vld [vmem:[%s638] sm:$0xff]
      %v640 = vld [vmem:[%s638 + $0x8] sm:$0xff]
      %v641 = vld [vmem:[%s638 + $0x10] sm:$0xff]
      %v642 = vld [vmem:[%s638 + $0x18] sm:$0xff]
      %v643 = vld [vmem:[%s638 + $0x20] sm:$0xff]
      %v644 = vld [vmem:[%s638 + $0x28] sm:$0xff]
      %v645 = vld [vmem:[%s638 + $0x30] sm:$0xff]
      %v646 = vld [vmem:[%s638 + $0x38] sm:$0xff]
      %v647 = vld [vmem:[%s638 + $0x40] sm:$0xff]
      %v648 = vld [vmem:[%s638 + $0x48] sm:$0xff]
      %v649 = vld [vmem:[%s638 + $0x50] sm:$0xff]
      %v650 = vld [vmem:[%s638 + $0x58] sm:$0xff]
      %v651 = vld [vmem:[%s638 + $0x60] sm:$0xff]
      %v652 = vld [vmem:[%s638 + $0x68] sm:$0xff]
      %v653 = vld [vmem:[%s638 + $0x70] sm:$0xff]
      %v654 = vld [vmem:[%s638 + $0x78] sm:$0xff]
      %655 = vmatprep.subr.mxu0 0.0
      %656 = vmatpush1.msra.mxu0 %v654
      %657 = vmatprep.subr.mxu0 0.0
      %658 = vmatpush1.msra.mxu0 %v653
      %659 = vmatprep.subr.mxu0 0.0
      %660 = vmatpush1.msra.mxu0 %v652
      %661 = vmatprep.subr.mxu0 0.0
      %662 = vmatpush1.msra.mxu0 %v651
      %663 = vmatprep.subr.mxu0 0.0
      %664 = vmatpush1.msra.mxu0 %v650
      %665 = vmatprep.subr.mxu0 0.0
      %666 = vmatpush1.msra.mxu0 %v649
      %667 = vmatprep.subr.mxu0 0.0
      %668 = vmatpush1.msra.mxu0 %v648
      %669 = vmatprep.subr.mxu0 0.0
      %670 = vmatpush1.msra.mxu0 %v647
      %671 = vmatprep.subr.mxu0 0.0
      %672 = vmatpush1.msra.mxu0 %v646
      %673 = vmatprep.subr.mxu0 0.0
      %674 = vmatpush1.msra.mxu0 %v645
      %675 = vmatprep.subr.mxu0 0.0
      %676 = vmatpush1.msra.mxu0 %v644
      %677 = vmatprep.subr.mxu0 0.0
      %678 = vmatpush1.msra.mxu0 %v643
      %679 = vmatprep.subr.mxu0 0.0
      %680 = vmatpush1.msra.mxu0 %v642
      %681 = vmatprep.subr.mxu0 0.0
      %682 = vmatpush1.msra.mxu0 %v641
      %683 = vmatprep.subr.mxu0 0.0
      %684 = vmatpush1.msra.mxu0 %v640
      %685 = vmatprep.subr.mxu0 0.0
      %686 = vmatpush1.msra.mxu0 %v639
      %687 = vmatprep.subr.mxu0 0.0
      %688 = vmatpush2.msra.mxu0 0.0
      %689 = vmatprep.subr.mxu0 0.0
      %690 = vmatpush2.msra.mxu0 0.0
      %691 = vmatprep.subr.mxu0 0.0
      %692 = vmatpush2.msra.mxu0 0.0
      %693 = vmatprep.subr.mxu0 0.0
      %694 = vmatpush2.msra.mxu0 0.0
      %695 = vmatprep.subr.mxu0 0.0
      %696 = vmatpush2.msra.mxu0 0.0
      %697 = vmatprep.subr.mxu0 0.0
      %698 = vmatpush2.msra.mxu0 0.0
      %699 = vmatprep.subr.mxu0 0.0
      %700 = vmatpush2.msra.mxu0 0.0
      %701 = vmatprep.subr.mxu0 0.0
      %702 = vmatpush2.msra.mxu0 0.0
      %703 = vmatprep.subr.mxu0 0.0
      %704 = vmatpush2.msra.mxu0 0.0
      %705 = vmatprep.subr.mxu0 0.0
      %706 = vmatpush2.msra.mxu0 0.0
      %707 = vmatprep.subr.mxu0 0.0
      %708 = vmatpush2.msra.mxu0 0.0
      %709 = vmatprep.subr.mxu0 0.0
      %710 = vmatpush2.msra.mxu0 0.0
      %711 = vmatprep.subr.mxu0 0.0
      %712 = vmatpush2.msra.mxu0 0.0
      %713 = vmatprep.subr.mxu0 0.0
      %714 = vmatpush2.msra.mxu0 0.0
      %715 = vmatprep.subr.mxu0 0.0
      %716 = vmatpush2.msra.mxu0 0.0
      %717 = vmatprep.subr.mxu0 0.0
      %718 = vmatpush2.msra.mxu0 0.0
      %719 = vmatprep.mubr.f32.mxu0 0.0
      %720 = vmatmul.mubr.f32.gmra.mxu0 %v387
      %v721 = vpop.f32.mrf.mxu0
      %v722 = vadd.f32 0.0, %v721
      %v723 = vpop.f32.mrf.mxu0
      %724 = vmatprep.mubr.f32.mxu0 0.0
      %725 = vmatmul.mubr.f32.gmra.mxu0 %v388
      %v726 = vpop.f32.mrf.mxu0
      %v727 = vadd.f32 0.0, %v726
      %v728 = vpop.f32.mrf.mxu0
      %729 = vmatprep.mubr.f32.mxu0 0.0
      %730 = vmatmul.mubr.f32.gmra.mxu0 %v389
      %v731 = vpop.f32.mrf.mxu0
      %v732 = vadd.f32 0.0, %v731
      %v733 = vpop.f32.mrf.mxu0
      %734 = vmatprep.mubr.f32.mxu0 0.0
      %735 = vmatmul.mubr.f32.gmra.mxu0 %v390
      %v736 = vpop.f32.mrf.mxu0
      %v737 = vadd.f32 0.0, %v736
      %v738 = vpop.f32.mrf.mxu0
      %739 = vmatprep.mubr.f32.mxu0 0.0
      %740 = vmatmul.mubr.f32.gmra.mxu0 %v391
      %v741 = vpop.f32.mrf.mxu0
      %v742 = vadd.f32 0.0, %v741
      %v743 = vpop.f32.mrf.mxu0
      %744 = vmatprep.mubr.f32.mxu0 0.0
      %745 = vmatmul.mubr.f32.gmra.mxu0 %v392
      %v746 = vpop.f32.mrf.mxu0
      %v747 = vadd.f32 0.0, %v746
      %v748 = vpop.f32.mrf.mxu0
      %749 = vmatprep.mubr.f32.mxu0 0.0
      %750 = vmatmul.mubr.f32.gmra.mxu0 %v393
      %v751 = vpop.f32.mrf.mxu0
      %v752 = vadd.f32 0.0, %v751
      %v753 = vpop.f32.mrf.mxu0
      %754 = vmatprep.mubr.f32.mxu0 0.0
      %755 = vmatmul.mubr.f32.gmra.mxu0 %v394
      %v756 = vpop.f32.mrf.mxu0
      %v757 = vadd.f32 0.0, %v756
      %v758 = vpop.f32.mrf.mxu0
      %759 = vdwg.mxu0
      %v760 = vadd.f32 %v600, %v722
      %v761 = vadd.f32 %v605, %v727
      %v762 = vadd.f32 %v610, %v732
      %v763 = vadd.f32 %v615, %v737
      %v764 = vadd.f32 %v620, %v742
      %v765 = vadd.f32 %v625, %v747
      %v766 = vadd.f32 %v630, %v752
      %v767 = vadd.f32 %v635, %v757
      %v768 = vld [vmem:[%s2] sm:$0x1]
      %v770 = vlaneseq
      %v771 = vshrl.u32 %v770, 7
      %v772 = vsub.s32 0, %v771
      %v773 = vrot.slane %v768, %v772
      %v775 = vadd.f32 %v760, %v773
      %v776 = vadd.f32 %v761, %v773
      %v777 = vadd.f32 %v762, %v773
      %v778 = vadd.f32 %v763, %v773
      %v779 = vadd.f32 %v764, %v773
      %v780 = vadd.f32 %v765, %v773
      %v781 = vadd.f32 %v766, %v773
      %v782 = vadd.f32 %v767, %v773
      %783 = vst [vmem:[%s260] sm:$0xff] %v775
      %784 = vst [vmem:[%s260 + $0x8] sm:$0xff] %v776
      %785 = vst [vmem:[%s260 + $0x10] sm:$0xff] %v777
      %786 = vst [vmem:[%s260 + $0x18] sm:$0xff] %v778
      %787 = vst [vmem:[%s260 + $0x20] sm:$0xff] %v779
      %788 = vst [vmem:[%s260 + $0x28] sm:$0xff] %v780
      %789 = vst [vmem:[%s260 + $0x30] sm:$0xff] %v781
      %790 = vst [vmem:[%s260 + $0x38] sm:$0xff] %v782
      %v791 = vadd.f32 %v775, %v776
      %v792 = vadd.f32 %v791, %v777
      %v793 = vadd.f32 %v792, %v778
      %v794 = vadd.f32 %v793, %v779
      %v795 = vadd.f32 %v794, %v780
      %v796 = vadd.f32 %v795, %v781
      %v797 = vadd.f32 %v796, %v782
      %v798 = vrot.slane %v797, 4
      %v799 = vadd.f32 %v797, %v798
      %v800 = vrot.slane %v799, 2
      %v801 = vadd.f32 %v799, %v800
      %v802 = vrot.slane %v801, 1
      %v803 = vadd.f32 %v801, %v802
      %v804 = vmul.f32 %v775, %v775
      %v805 = vmul.f32 %v776, %v776
      %v806 = vmul.f32 %v777, %v777
      %v807 = vmul.f32 %v778, %v778
      %v808 = vmul.f32 %v779, %v779
      %v809 = vmul.f32 %v780, %v780
      %v810 = vmul.f32 %v781, %v781
      %v811 = vmul.f32 %v782, %v782
      %v812 = vadd.f32 %v804, %v805
      %v813 = vadd.f32 %v812, %v806
      %v814 = vadd.f32 %v813, %v807
      %v815 = vadd.f32 %v814, %v808
      %v816 = vadd.f32 %v815, %v809
      %v817 = vadd.f32 %v816, %v810
      %v818 = vadd.f32 %v817, %v811
      %v819 = vrot.slane %v818, 4
      %v820 = vadd.f32 %v818, %v819
      %v821 = vrot.slane %v820, 2
      %v822 = vadd.f32 %v820, %v821
      %v823 = vrot.slane %v822, 1
      %v824 = vadd.f32 %v822, %v823
      %vm825 = vcmp.eq.s32.totalorder %v313, 0
      %v826 = vsel %vm825, %v803, %v824
      %827 = vst [vmem:[%s265] sm:$0x3] %v826
      %s828 = smul.u32 8, %s18
      %p829 = scmp.lt.s32.totalorder %s828, 15
      %s830 = scalar_select %p829, %s828, 15
      %s831 = smul.addr %s830, 8
      %s832 = scalar_lea.vmem %s5, %s831
      %p833 = scmp.lt.s32.totalorder %s18, 1
      %s834 = scalar_select %p833, %s18, 1
      %s835 = smul.addr %s834, 2
      %s836 = scalar_lea.vmem %s6, %s835
      // Predicated region
      $region41: #{basic_block_3d.4} parent=39 // pred_check
        %p837 = pneg %p146
      $region42: #{basic_block_3d.4} parent=39 // pred_check_branch
        %839 = sbr.rel (%p837) target = $region44
      $region43: #{basic_block_3d.4} parent=39 // pred_region
        %s840 = smul.u32 8, %s18
      $region44: #{basic_block_3d.4} parent=39 // pred_fallthru
        _
      // Predicated region
      $region45: #{basic_block_3d.4} parent=39 // pred_check
        %p841 = pneg %p172
      $region46: #{basic_block_3d.4} parent=39 // pred_check_branch
        %843 = sbr.rel (%p841) target = $region48
      $region47: #{basic_block_3d.4} parent=39 // pred_region
        _
      $region48: #{basic_block_3d.4} parent=39 // pred_fallthru
        _
    $region40: #{basic_block_3d.4} parent=5 // pred_fallthru
      _
    %p844 = scmp.le.s32.totalorder 2, %s13
    // Predicated region
    $region49: #{basic_block_3d.4} parent=5 // pred_check
      %p845 = pneg %p844
    $region50: #{basic_block_3d.4} parent=5 // pred_check_branch
      %847 = sbr.rel (%p845) target = $region52
    $region51: #{basic_block_3d.4} parent=5 // pred_region
      %s848 = ssub.s32 %s13, 2
      // Predicated region
      $region53: #{basic_block_3d.4} parent=51 // pred_check
        %p849 = pneg %p152
      $region54: #{basic_block_3d.4} parent=51 // pred_check_branch
        %851 = sbr.rel (%p849) target = $region56
      $region55: #{basic_block_3d.4} parent=51 // pred_region
        %s852 = smul.u32 8, %s19
        %p853 = scmp.lt.s32.totalorder %s852, 15
        %s854 = scalar_select %p853, %s852, 15
        %s855 = smul.addr %s854, 8
        %s856 = scalar_lea.vmem %s5, %s855
      $region56: #{basic_block_3d.4} parent=51 // pred_fallthru
        _
      // Predicated region
      $region57: #{basic_block_3d.4} parent=51 // pred_check
        %p857 = pneg %p178
      $region58: #{basic_block_3d.4} parent=51 // pred_check_branch
        %859 = sbr.rel (%p857) target = $region60
      $region59: #{basic_block_3d.4} parent=51 // pred_region
        %p860 = scmp.lt.s32.totalorder %s19, 1
        %s861 = scalar_select %p860, %s19, 1
        %s862 = smul.addr %s861, 2
        %s863 = scalar_lea.vmem %s6, %s862
      $region60: #{basic_block_3d.4} parent=51 // pred_fallthru
        _
    $region52: #{basic_block_3d.4} parent=5 // pred_fallthru
      _
  $region6: #{basic_block_3d.4} parent=0 // loop_footer
    %s17 = sadd.s32 1, %s13
  $region7: #{basic_block_3d.4} parent=0 // loop_footer_branch
    %12 = sbr.rel target = $region3
  $region8: #{basic_block_3d.4} parent=0 // loop_exit
    _

// kernel: basic_block_3d.5
$region0: #{basic_block_3d.5}
  #allocation0 [shape = 'u32[]', space=smem, size = 0x4, offset = 0x4, fixed_abs, tag = 'smem constant byte address 0x4 - core index']
  #allocation1 [shape = 'u32[144,128]{1,0:T(1,128)}', space=vmem, size = 0x12000, scoped, tag = 'internal scratch']
  %s0 = inlined_call_operand.vmem [shape: f32[128,128], index: 0, kind: input, shape index: {}]
  %s1 = inlined_call_operand.vmem [shape: f32[1,128], index: 1, kind: input, shape index: {}]
  %s2 = inlined_call_operand.vmem [shape: f32[1,128], index: 2, kind: input, shape index: {}]
  %s3 = inlined_call_operand.vmem [shape: f32[128,128], index: 3, kind: input, shape index: {}]
  %s4 = inlined_call_operand.vmem [shape: f32[128,128], index: 4, kind: output, shape index: {}]
  %s5 = sld [smem:[#allocation0]]
  $region49: #{basic_block_3d.5} parent=0
    _
  %s7 = ssub.s32 1, %s5
  %s8 = scalar_select 0, %s7, %s5
  loop: start=0, step=1, limit=4
  $region2: #{basic_block_3d.5} parent=0 // loop_pre_header
    _
  $region3: #{basic_block_3d.5} parent=0 // loop_header
    %s10 = sphi 0, %s14
    %p11 = scmp.ge.s32.totalorder %s10, 4
    %s20 = sphi 0, %s22
    %s23 = sphi 0, %s20
    %s24 = sphi 0, %s23
    %s40 = sphi 0, %s24
    %s44 = sphi 0, %s44
    %s46 = sphi 0, %s44
    %s47 = sphi 0, %s46
    %s61 = sphi 0, %s47
    %s65 = sphi 0, %s65
    %s67 = sphi 0, %s65
    %s68 = sphi 0, %s67
    %s82 = sphi 0, %s68
    %s88 = sphi 0, %s90
    %s91 = sphi 0, %s88
    %s92 = sphi 0, %s91
    %s108 = sphi 0, %s92
    %s114 = sphi 0, %s116
    %s117 = sphi 0, %s114
    %s118 = sphi 0, %s117
    %s134 = sphi 0, %s118
  $region4: #{basic_block_3d.5} parent=0 // loop_header_branch
    %13 = sbr.rel (%p11) target = $region8
  $region5: #{basic_block_3d.5} parent=0 // loop_body
    %s15 = ssub.s32 %s10, 1
    %s16 = ssub.s32 %s10, 2
    %s17 = sadd.s32 %s10, 1
    %s18 = ssub.s32 %s10, %s17
    %p19 = scmp.eq.s32.totalorder %s18, 0
    %s21 = sadd.s32 %s20, 1
    %s22 = scalar_select %p19, %s20, %s21
    %p25 = pneg %p19
    %p26 = scmp.eq.s32.totalorder %s10, 1
    %p27 = por %p25, %p26
    %p28 = scmp.ne.s32.totalorder %s20, %s23
    %p29 = scmp.eq.s32.totalorder %s10, 0
    %p30 = por %p28, %p29
    %p31 = scmp.ne.s32.totalorder %s20, %s23
    %p32 = scmp.eq.s32.totalorder %s15, 1
    %p33 = por %p31, %p32
    %p34 = scmp.ne.s32.totalorder %s23, %s24
    %p35 = scmp.eq.s32.totalorder %s15, 0
    %p36 = por %p34, %p35
    %p37 = scmp.ne.s32.totalorder %s23, %s24
    %p38 = scmp.eq.s32.totalorder %s16, 1
    %p39 = por %p37, %p38
    %p41 = scmp.ne.s32.totalorder %s24, %s40
    %p42 = scmp.eq.s32.totalorder %s16, 0
    %p43 = por %p41, %p42
    %s45 = sadd.s32 %s44, 1
    %p48 = scmp.eq.s32.totalorder %s10, 1
    %p49 = scmp.ne.s32.totalorder %s44, %s46
    %p50 = scmp.eq.s32.totalorder %s10, 0
    %p51 = por %p49, %p50
    %p52 = scmp.ne.s32.totalorder %s44, %s46
    %p53 = scmp.eq.s32.totalorder %s15, 1
    %p54 = por %p52, %p53
    %p55 = scmp.ne.s32.totalorder %s46, %s47
    %p56 = scmp.eq.s32.totalorder %s15, 0
    %p57 = por %p55, %p56
    %p58 = scmp.ne.s32.totalorder %s46, %s47
    %p59 = scmp.eq.s32.totalorder %s16, 1
    %p60 = por %p58, %p59
    %p62 = scmp.ne.s32.totalorder %s47, %s61
    %p63 = scmp.eq.s32.totalorder %s16, 0
    %p64 = por %p62, %p63
    %s66 = sadd.s32 %s65, 1
    %p69 = scmp.eq.s32.totalorder %s10, 1
    %p70 = scmp.ne.s32.totalorder %s65, %s67
    %p71 = scmp.eq.s32.totalorder %s10, 0
    %p72 = por %p70, %p71
    %p73 = scmp.ne.s32.totalorder %s65, %s67
    %p74 = scmp.eq.s32.totalorder %s15, 1
    %p75 = por %p73, %p74
    %p76 = scmp.ne.s32.totalorder %s67, %s68
    %p77 = scmp.eq.s32.totalorder %s15, 0
    %p78 = por %p76, %p77
    %p79 = scmp.ne.s32.totalorder %s67, %s68
    %p80 = scmp.eq.s32.totalorder %s16, 1
    %p81 = por %p79, %p80
    %p83 = scmp.ne.s32.totalorder %s68, %s82
    %p84 = scmp.eq.s32.totalorder %s16, 0
    %p85 = por %p83, %p84
    %s86 = ssub.s32 %s10, %s17
    %p87 = scmp.eq.s32.totalorder %s86, 0
    %s89 = sadd.s32 %s88, 1
    %s90 = scalar_select %p87, %s88, %s89
    %p93 = pneg %p87
    %p94 = scmp.eq.s32.totalorder %s10, 1
    %p95 = por %p93, %p94
    %p96 = scmp.ne.s32.totalorder %s88, %s91
    %p97 = scmp.eq.s32.totalorder %s10, 0
    %p98 = por %p96, %p97
    %p99 = scmp.ne.s32.totalorder %s88, %s91
    %p100 = scmp.eq.s32.totalorder %s15, 1
    %p101 = por %p99, %p100
    %p102 = scmp.ne.s32.totalorder %s91, %s92
    %p103 = scmp.eq.s32.totalorder %s15, 0
    %p104 = por %p102, %p103
    %p105 = scmp.ne.s32.totalorder %s91, %s92
    %p106 = scmp.eq.s32.totalorder %s16, 1
    %p107 = por %p105, %p106
    %p109 = scmp.ne.s32.totalorder %s92, %s108
    %p110 = scmp.eq.s32.totalorder %s16, 0
    %p111 = por %p109, %p110
    %s112 = ssub.s32 %s10, %s17
    %p113 = scmp.eq.s32.totalorder %s112, 0
    %s115 = sadd.s32 %s114, 1
    %s116 = scalar_select %p113, %s114, %s115
    %p119 = pneg %p113
    %p120 = scmp.eq.s32.totalorder %s10, 1
    %p121 = por %p119, %p120
    %p122 = scmp.ne.s32.totalorder %s114, %s117
    %p123 = scmp.eq.s32.totalorder %s10, 0
    %p124 = por %p122, %p123
    %p125 = scmp.ne.s32.totalorder %s114, %s117
    %p126 = scmp.eq.s32.totalorder %s15, 1
    %p127 = por %p125, %p126
    %p128 = scmp.ne.s32.totalorder %s117, %s118
    %p129 = scmp.eq.s32.totalorder %s15, 0
    %p130 = por %p128, %p129
    %p131 = scmp.ne.s32.totalorder %s117, %s118
    %p132 = scmp.eq.s32.totalorder %s16, 1
    %p133 = por %p131, %p132
    %p135 = scmp.ne.s32.totalorder %s118, %s134
    %p136 = scmp.eq.s32.totalorder %s16, 0
    %p137 = por %p135, %p136
    %p138 = scmp.le.s32.totalorder 1, %s10
    %p139 = scmp.lt.s32.totalorder %s10, 3
    %p140 = pnand %p138, %p139
    %p141 = pneg %p140
    // Predicated region
    $region9: #{basic_block_3d.5} parent=5 // pred_check
      _
    $region10: #{basic_block_3d.5} parent=5 // pred_check_branch
      %143 = sbr.rel (%p140) target = $region12
    $region11: #{basic_block_3d.5} parent=5 // pred_region
      %s144 = ssub.s32 %s10, 1
      // Predicated region
      $region13: #{basic_block_3d.5} parent=11 // pred_check
        %p145 = pneg %p57
      $region14: #{basic_block_3d.5} parent=11 // pred_check_branch
        %147 = sbr.rel (%p145) target = $region16
      $region15: #{basic_block_3d.5} parent=11 // pred_region
        _
      $region16: #{basic_block_3d.5} parent=11 // pred_fallthru
        _
      // Predicated region
      $region17: #{basic_block_3d.5} parent=11 // pred_check
        %p148 = pneg %p78
      $region18: #{basic_block_3d.5} parent=11 // pred_check_branch
        %150 = sbr.rel (%p148) target = $region20
      $region19: #{basic_block_3d.5} parent=11 // pred_region
        _
      $region20: #{basic_block_3d.5} parent=11 // pred_fallthru
        _
    $region12: #{basic_block_3d.5} parent=5 // pred_fallthru
      _
    %p151 = scmp.lt.s32.totalorder %s10, 2
    // Predicated region
    $region21: #{basic_block_3d.5} parent=5 // pred_check
      %p152 = pneg %p151
    $region22: #{basic_block_3d.5} parent=5 // pred_check_branch
      %154 = sbr.rel (%p152) target = $region24
    $region23: #{basic_block_3d.5} parent=5 // pred_region
      // Predicated region
      $region25: #{basic_block_3d.5} parent=23 // pred_check
        %p155 = pneg %p30
      $region26: #{basic_block_3d.5} parent=23 // pred_check_branch
        %157 = sbr.rel (%p155) target = $region28
      $region27: #{basic_block_3d.5} parent=23 // pred_region
        %s158 = smul.u32 8, %s10
        %p159 = scmp.lt.s32.totalorder %s158, 15
        %s160 = scalar_select %p159, %s158, 15
        %s161 = smul.addr %s160, 8
        %s162 = scalar_lea.vmem %s0, %s161
        %s163 = smul.u32 8, %s10
      $region28: #{basic_block_3d.5} parent=23 // pred_fallthru
        _
      // Predicated region
      $region29: #{basic_block_3d.5} parent=23 // pred_check
        %p164 = pneg %p98
      $region30: #{basic_block_3d.5} parent=23 // pred_check_branch
        %166 = sbr.rel (%p164) target = $region32
      $region31: #{basic_block_3d.5} parent=23 // pred_region
        %s167 = smul.u32 8, %s10
        %p168 = scmp.lt.s32.totalorder %s167, 15
        %s169 = scalar_select %p168, %s167, 15
        %s170 = smul.addr %s169, 8
        %s171 = scalar_lea.vmem %s3, %s170
        %s172 = smul.u32 8, %s10
      $region32: #{basic_block_3d.5} parent=23 // pred_fallthru
        _
    $region24: #{basic_block_3d.5} parent=5 // pred_fallthru
      _
    %p173 = scmp.le.s32.totalorder 1, %s10
    %p174 = scmp.lt.s32.totalorder %s10, 3
    %p175 = pnand %p173, %p174
    %p176 = pneg %p175
    // Predicated region
    $region33: #{basic_block_3d.5} parent=5 // pred_check
      _
    $region34: #{basic_block_3d.5} parent=5 // pred_check_branch
      %178 = sbr.rel (%p175) target = $region36
    $region35: #{basic_block_3d.5} parent=5 // pred_region
      %s179 = ssub.s32 %s10, 1
      %s180 = smul.u32 8, %s15
      %p181 = scmp.lt.s32.totalorder %s180, 15
      %s182 = scalar_select %p181, %s180, 15
      %s183 = smul.addr %s182, 8
      %s184 = scalar_lea.vmem %s0, %s183
      %p185 = pneg %p36
      %p186 = pneg %p33
      %p187 = pneg %p57
      %p188 = pneg %p54
      %p189 = pneg %p78
      %p190 = pneg %p75
      %s191 = smul.u32 8, %s15
      %p192 = scmp.lt.s32.totalorder %s191, 15
      %s193 = scalar_select %p192, %s191, 15
      %s194 = smul.addr %s193, 8
      %s195 = scalar_lea.vmem %s3, %s194
      %p196 = pneg %p104
      %p197 = pneg %p101
      %p198 = pneg %p130
      %p199 = pneg %p127
      %s200 = smul.u32 8, %s15
      %p201 = scmp.lt.s32.totalorder %s200, 15
      %s202 = scalar_select %p201, %s200, 15
      %s203 = smul.addr %s202, 8
      %s204 = scalar_lea.vmem %s4, %s203
      %s205 = smul.u32 8, %s15
      %p206 = scmp.lt.s32.totalorder %s205, 15
      %s207 = scalar_select %p206, %s205, 15
      %s208 = smul.addr %s207, 8
      %s209 = scalar_lea.vmem %s0, %s208
      %s210 = smul.u32 8, %s15
      %s211 = smul.u32 8, %s15
      %p212 = scmp.lt.s32.totalorder %s211, 15
      %s213 = scalar_select %p212, %s211, 15
      %s214 = smul.addr %s213, 8
      %s215 = scalar_lea.vmem %s3, %s214
      %s216 = smul.u32 8, %s15
      %s217 = smul.u32 8, %s15
      %p218 = scmp.lt.s32.totalorder %s217, 15
      %s219 = scalar_select %p218, %s217, 15
      %s220 = smul.addr %s219, 8
      %s221 = scalar_lea.vmem %s4, %s220
      %s222 = smul.u32 8, %s15
      %v223 = vld [vmem:[%s209] sm:$0xff]
      %v224 = vld [vmem:[%s209 + $0x8] sm:$0xff]
      %v225 = vld [vmem:[%s209 + $0x10] sm:$0xff]
      %v226 = vld [vmem:[%s209 + $0x18] sm:$0xff]
      %v227 = vld [vmem:[%s209 + $0x20] sm:$0xff]
      %v228 = vld [vmem:[%s209 + $0x28] sm:$0xff]
      %v229 = vld [vmem:[%s209 + $0x30] sm:$0xff]
      %v230 = vld [vmem:[%s209 + $0x38] sm:$0xff]
      %v231 = vld [vmem:[%s1] sm:$0x1]
      %v233 = vlaneseq
      %v234 = vshrl.u32 %v233, 7
      %v235 = vsub.s32 0, %v234
      %v236 = vrot.slane %v231, %v235
      %v238 = vmul.f32 %v223, %v236
      %v239 = vmul.f32 %v224, %v236
      %v240 = vmul.f32 %v225, %v236
      %v241 = vmul.f32 %v226, %v236
      %v242 = vmul.f32 %v227, %v236
      %v243 = vmul.f32 %v228, %v236
      %v244 = vmul.f32 %v229, %v236
      %v245 = vmul.f32 %v230, %v236
      %v246 = vld [vmem:[%s2] sm:$0x1]
      %v248 = vlaneseq
      %v249 = vshrl.u32 %v248, 7
      %v250 = vsub.s32 0, %v249
      %v251 = vrot.slane %v246, %v250
      %v253 = vadd.f32 %v238, %v251
      %v254 = vadd.f32 %v239, %v251
      %v255 = vadd.f32 %v240, %v251
      %v256 = vadd.f32 %v241, %v251
      %v257 = vadd.f32 %v242, %v251
      %v258 = vadd.f32 %v243, %v251
      %v259 = vadd.f32 %v244, %v251
      %v260 = vadd.f32 %v245, %v251
      %v261 = vld [vmem:[%s215] sm:$0xff]
      %v262 = vld [vmem:[%s215 + $0x8] sm:$0xff]
      %v263 = vld [vmem:[%s215 + $0x10] sm:$0xff]
      %v264 = vld [vmem:[%s215 + $0x18] sm:$0xff]
      %v265 = vld [vmem:[%s215 + $0x20] sm:$0xff]
      %v266 = vld [vmem:[%s215 + $0x28] sm:$0xff]
      %v267 = vld [vmem:[%s215 + $0x30] sm:$0xff]
      %v268 = vld [vmem:[%s215 + $0x38] sm:$0xff]
      %v269 = vadd.f32 %v253, %v261
      %v270 = vadd.f32 %v254, %v262
      %v271 = vadd.f32 %v255, %v263
      %v272 = vadd.f32 %v256, %v264
      %v273 = vadd.f32 %v257, %v265
      %v274 = vadd.f32 %v258, %v266
      %v275 = vadd.f32 %v259, %v267
      %v276 = vadd.f32 %v260, %v268
      %v277 = vmax.f32 %v269, 0.0
      %v278 = vmax.f32 %v270, 0.0
      %v279 = vmax.f32 %v271, 0.0
      %v280 = vmax.f32 %v272, 0.0
      %v281 = vmax.f32 %v273, 0.0
      %v282 = vmax.f32 %v274, 0.0
      %v283 = vmax.f32 %v275, 0.0
      %v284 = vmax.f32 %v276, 0.0
      %285 = vst [vmem:[%s221] sm:$0xff] %v277
      %286 = vst [vmem:[%s221 + $0x8] sm:$0xff] %v278
      %287 = vst [vmem:[%s221 + $0x10] sm:$0xff] %v279
      %288 = vst [vmem:[%s221 + $0x18] sm:$0xff] %v280
      %289 = vst [vmem:[%s221 + $0x20] sm:$0xff] %v281
      %290 = vst [vmem:[%s221 + $0x28] sm:$0xff] %v282
      %291 = vst [vmem:[%s221 + $0x30] sm:$0xff] %v283
      %292 = vst [vmem:[%s221 + $0x38] sm:$0xff] %v284
      %s293 = smul.u32 8, %s15
      %p294 = scmp.lt.s32.totalorder %s293, 15
      %s295 = scalar_select %p294, %s293, 15
      %s296 = smul.addr %s295, 8
      %s297 = scalar_lea.vmem %s4, %s296
      // Predicated region
      $region37: #{basic_block_3d.5} parent=35 // pred_check
        %p298 = pneg %p127
      $region38: #{basic_block_3d.5} parent=35 // pred_check_branch
        %300 = sbr.rel (%p298) target = $region40
      $region39: #{basic_block_3d.5} parent=35 // pred_region
        %s301 = smul.u32 8, %s15
      $region40: #{basic_block_3d.5} parent=35 // pred_fallthru
        _
    $region36: #{basic_block_3d.5} parent=5 // pred_fallthru
      _
    %p302 = scmp.le.s32.totalorder 2, %s10
    // Predicated region
    $region41: #{basic_block_3d.5} parent=5 // pred_check
      %p303 = pneg %p302
    $region42: #{basic_block_3d.5} parent=5 // pred_check_branch
      %305 = sbr.rel (%p303) target = $region44
    $region43: #{basic_block_3d.5} parent=5 // pred_region
      %s306 = ssub.s32 %s10, 2
      // Predicated region
      $region45: #{basic_block_3d.5} parent=43 // pred_check
        %p307 = pneg %p133
      $region46: #{basic_block_3d.5} parent=43 // pred_check_branch
        %309 = sbr.rel (%p307) target = $region48
      $region47: #{basic_block_3d.5} parent=43 // pred_region
        %s310 = smul.u32 8, %s16
        %p311 = scmp.lt.s32.totalorder %s310, 15
        %s312 = scalar_select %p311, %s310, 15
        %s313 = smul.addr %s312, 8
        %s314 = scalar_lea.vmem %s4, %s313
      $region48: #{basic_block_3d.5} parent=43 // pred_fallthru
        _
    $region44: #{basic_block_3d.5} parent=5 // pred_fallthru
      _
  $region6: #{basic_block_3d.5} parent=0 // loop_footer
    %s14 = sadd.s32 1, %s10
  $region7: #{basic_block_3d.5} parent=0 // loop_footer_branch
    %9 = sbr.rel target = $region3
  $region8: #{basic_block_3d.5} parent=0 // loop_exit
    _

</llo_original>
